<compile_context>
chip_gen: v6e
topology: v6e:2x2x1
jax: 0.10.0
libtpu: 0.0.40
codegen_flags: <defaults>
</compile_context>

<pallas_src>
import functools

import jax
import jax.numpy as jnp
from jax.experimental import pallas as pl
from jax.experimental.pallas import tpu as pltpu

NEG_SLOPE = 0.01   # torch.nn.LeakyReLU default
LN_EPS = 1e-5      # torch.nn.LayerNorm default


def _leaky_relu(x):
    return jnp.where(x > 0, x, NEG_SLOPE * x)


def _block_diag(w, pack):
    """[din, dout] -> block-diagonal [pack*din, pack*dout] with `pack` copies."""
    din, dout = w.shape
    eye = jnp.eye(pack, dtype=w.dtype)
    return jnp.einsum("pq,ij->piqj", eye, w).reshape(pack * din, pack * dout)


def pack_params(params, d_src, d_dst, pack, compute_dtype=jnp.bfloat16):
    """One-time (outside jit) preparation of packed / block-diagonal params."""
    w0, b0, w1, b1, w2, b2, gamma, beta = params
    out_size = w2.shape[1]
    f32 = jnp.float32
    w0s = _block_diag(w0[:d_src], pack).astype(compute_dtype)
    w0d = _block_diag(w0[d_src:d_src + d_dst], pack).astype(compute_dtype)
    w0e = _block_diag(w0[d_src + d_dst:], pack).astype(compute_dtype)
    w1bd = _block_diag(w1, pack).astype(compute_dtype)
    w2bd = _block_diag(w2, pack).astype(compute_dtype)
    b0t = jnp.tile(b0, (1, pack)).astype(f32)
    b1t = jnp.tile(b1, (1, pack)).astype(f32)
    b2t = jnp.tile(b2, (1, pack)).astype(f32)
    # Block-diagonal averaging matrix: (h @ mavg) broadcasts the per-segment
    # (= per-edge) mean across its own 32-lane segment.
    mavg = _block_diag(jnp.full((out_size, out_size), 1.0 / out_size, f32), pack)
    gt = jnp.tile(gamma, (1, pack)).astype(f32)
    bt = jnp.tile(beta, (1, pack)).astype(f32)
    return (w0s, w0d, w0e, b0t, w1bd, b1t, w2bd, b2t, mavg, gt, bt)


def edge_mlp_kernel(src_ref, dst_ref, edg_ref,
                    w0s_ref, w0d_ref, w0e_ref, b0_ref,
                    w1_ref, b1_ref, w2_ref, b2_ref,
                    mavg_ref, g_ref, beta_ref, o_ref):
    """3 matmuls + LeakyReLU + segmented LayerNorm on one packed edge tile."""
    f32 = jnp.float32

    # Layer 0: concat is fused away by splitting w0 row-wise (src/dest/edge).
    h = (jnp.dot(src_ref[...], w0s_ref[...], preferred_element_type=f32)
         + jnp.dot(dst_ref[...], w0d_ref[...], preferred_element_type=f32)
         + jnp.dot(edg_ref[...], w0e_ref[...], preferred_element_type=f32)
         + b0_ref[...])
    h = _leaky_relu(h)

    # Hidden layer 1 (128x128 block-diagonal weight -> lane-dense MXU work).
    h = jnp.dot(h.astype(w1_ref.dtype), w1_ref[...],
                preferred_element_type=f32) + b1_ref[...]
    h = _leaky_relu(h)

    # Output layer.
    h = jnp.dot(h.astype(w2_ref.dtype), w2_ref[...],
                preferred_element_type=f32) + b2_ref[...]
    # activate_last
    h = _leaky_relu(h)

    # Per-edge LayerNorm over each 32-lane segment via block-diag averaging
    # matmuls (exact segmented mean / biased variance), all in f32.
    mu = jnp.dot(h, mavg_ref[...], preferred_element_type=f32)
    d = h - mu
    var = jnp.dot(d * d, mavg_ref[...], preferred_element_type=f32)
    out = d * jax.lax.rsqrt(var + LN_EPS) * g_ref[...] + beta_ref[...]
    o_ref[...] = out.astype(o_ref.dtype)


@functools.partial(jax.jit, static_argnames=("pack", "tile_rows"))
def edge_model_forward(src, dest, edge_attr, packed, *, pack=4, tile_rows=256):
    """Forward pass. `packed` comes from pack_params(). u/batch are unused."""
    (w0s, w0d, w0e, b0t, w1bd, b1t, w2bd, b2t, mavg, gt, bt) = packed
    cdt = w0s.dtype
    E, d_src = src.shape
    d_dst = dest.shape[1]
    d_edge = edge_attr.shape[1]
    out_lanes = w2bd.shape[1]            # pack * out_size
    out_size = out_lanes // pack

    # Pad edge count up to a multiple of `pack` (rows of zeros are harmless:
    # LayerNorm of zeros is finite, and padded rows are sliced off below).
    e_pad = ((E + pack - 1) // pack) * pack
    if e_pad != E:
        padn = e_pad - E
        src = jnp.pad(src, ((0, padn), (0, 0)))
        dest = jnp.pad(dest, ((0, padn), (0, 0)))
        edge_attr = jnp.pad(edge_attr, ((0, padn), (0, 0)))
    rows = e_pad // pack

    # Pack `pack` edges per row (contiguous row-major reshape, no data shuffle)
    # and cast streaming activations to the matmul compute dtype (bf16).
    src_p = src.reshape(rows, pack * d_src).astype(cdt)
    dst_p = dest.reshape(rows, pack * d_dst).astype(cdt)
    edg_p = edge_attr.reshape(rows, pack * d_edge).astype(cdt)

    # Tile selection: large tiles (low per-step overhead), but at least two
    # grid steps when possible so both v7x TensorCores get work.
    tr = min(tile_rows, rows)
    if tr == rows and rows >= 32:
        tr = ((rows + 1) // 2 + 15) // 16 * 16   # ~half, multiple of 16
    grid = (pl.cdiv(rows, tr),)                  # masked partial last tile OK

    full = lambda i: (0, 0)
    stream = lambda i: (i, 0)

    out_p = pl.pallas_call(
        edge_mlp_kernel,
        out_shape=jax.ShapeDtypeStruct((rows, out_lanes), jnp.float32),
        grid_spec=pltpu.PrefetchScalarGridSpec(
            num_scalar_prefetch=0,
            grid=grid,
            in_specs=[
                pl.BlockSpec((tr, pack * d_src), stream),    # packed src
                pl.BlockSpec((tr, pack * d_dst), stream),    # packed dest
                pl.BlockSpec((tr, pack * d_edge), stream),   # packed edge_attr
                pl.BlockSpec(w0s.shape, full),               # w0 (src rows, bd)
                pl.BlockSpec(w0d.shape, full),               # w0 (dest rows, bd)
                pl.BlockSpec(w0e.shape, full),               # w0 (edge rows, bd)
                pl.BlockSpec(b0t.shape, full),               # b0 tiled
                pl.BlockSpec(w1bd.shape, full),              # w1 block-diag
                pl.BlockSpec(b1t.shape, full),               # b1 tiled
                pl.BlockSpec(w2bd.shape, full),              # w2 block-diag
                pl.BlockSpec(b2t.shape, full),               # b2 tiled
                pl.BlockSpec(mavg.shape, full),              # LN averaging mat
                pl.BlockSpec(gt.shape, full),                # gamma tiled
                pl.BlockSpec(bt.shape, full),                # beta tiled
            ],
            out_specs=pl.BlockSpec((tr, out_lanes), stream),
        ),
        compiler_params=pltpu.CompilerParams(
            dimension_semantics=("parallel",)),
    )(src_p, dst_p, edg_p, w0s, w0d, w0e, b0t, w1bd, b1t, w2bd, b2t, mavg, gt, bt)

    out = out_p.reshape(e_pad, out_size)
    return out[:E] if e_pad != E else out


def init_params(key, in_size, out_size, n_hidden, hidden_size):
    """Deterministic synthetic parameters. Weights stored as [in, out]."""
    assert n_hidden == 2, "this script builds the n_hidden=2 configuration"
    ks = jax.random.split(key, 6)
    scale = 0.1
    w0 = scale * jax.random.normal(ks[0], (in_size, hidden_size), jnp.float32)
    b0 = scale * jax.random.normal(ks[1], (1, hidden_size), jnp.float32)
    w1 = scale * jax.random.normal(ks[2], (hidden_size, hidden_size), jnp.float32)
    b1 = scale * jax.random.normal(ks[3], (1, hidden_size), jnp.float32)
    w2 = scale * jax.random.normal(ks[4], (hidden_size, out_size), jnp.float32)
    b2 = scale * jax.random.normal(ks[5], (1, out_size), jnp.float32)
    gamma = jnp.ones((1, out_size), jnp.float32)
    beta = jnp.zeros((1, out_size), jnp.float32)
    return (w0, b0, w1, b1, w2, b2, gamma, beta)


def reference_forward_f32(src, dest, edge_attr, params):
    """Pure-JAX f32 reference mirroring the PyTorch forward."""
    w0, b0, w1, b1, w2, b2, gamma, beta = params
    x = jnp.concatenate([src, dest, edge_attr], axis=1)
    h = _leaky_relu(x @ w0 + b0)
    h = _leaky_relu(h @ w1 + b1)
    h = _leaky_relu(h @ w2 + b2)
    mu = jnp.mean(h, axis=-1, keepdims=True)
    var = jnp.mean(jnp.square(h - mu), axis=-1, keepdims=True)
    return (h - mu) * jax.lax.rsqrt(var + LN_EPS) * gamma + beta


def reference_forward_matched(src, dest, edge_attr, params, d_src, d_dst,
                              compute_dtype):
    """Reference emulating the kernel's mixed precision (bf16 matmul inputs,
    f32 accumulation / elementwise), for a tight correctness check."""
    w0, b0, w1, b1, w2, b2, gamma, beta = params
    f32 = jnp.float32
    cdt = compute_dtype
    w0s, w0d, w0e = w0[:d_src], w0[d_src:d_src + d_dst], w0[d_src + d_dst:]
    h = (jnp.dot(src.astype(cdt), w0s.astype(cdt), preferred_element_type=f32)
         + jnp.dot(dest.astype(cdt), w0d.astype(cdt), preferred_element_type=f32)
         + jnp.dot(edge_attr.astype(cdt), w0e.astype(cdt), preferred_element_type=f32)
         + b0)
    h = _leaky_relu(h)
    h = jnp.dot(h.astype(cdt), w1.astype(cdt), preferred_element_type=f32) + b1
    h = _leaky_relu(h)
    h = jnp.dot(h.astype(cdt), w2.astype(cdt), preferred_element_type=f32) + b2
    h = _leaky_relu(h)
    mu = jnp.mean(h, axis=-1, keepdims=True)
    var = jnp.mean(jnp.square(h - mu), axis=-1, keepdims=True)
    return (h - mu) * jax.lax.rsqrt(var + LN_EPS) * gamma + beta


if __name__ == "__main__":
    # Small shapes implied by the forward: E edges, node feats, edge feats.
    E = 256                # number of edges
    node_dim = 8           # src / dest feature dim
    edge_dim = 16          # edge_attr feature dim
    in_size = 2 * node_dim + edge_dim   # 32
    hidden_size = 32
    out_size = 32
    n_hidden = 2
    PACK = 4               # edges packed per 128-lane row (4 * 32 = 128)

    key = jax.random.PRNGKey(0)
    k_src, k_dst, k_edge, k_par = jax.random.split(key, 4)
    src = jax.random.normal(k_src, (E, node_dim), jnp.float32)
    dest = jax.random.normal(k_dst, (E, node_dim), jnp.float32)
    edge_attr = jax.random.normal(k_edge, (E, edge_dim), jnp.float32)
    # (u, batch) are unused by EdgeModel.forward, matching the PyTorch module.

    params = init_params(k_par, in_size, out_size, n_hidden, hidden_size)
    packed = pack_params(params, node_dim, node_dim, PACK,
                         compute_dtype=jnp.bfloat16)

    out = edge_model_forward(src, dest, edge_attr, packed, pack=PACK)
    out = jax.block_until_ready(out)
    assert out.shape == (E, out_size)

    # Tight check against a precision-matched (bf16-matmul) reference.
    ref_m = reference_forward_matched(src, dest, edge_attr, params,
                                      node_dim, node_dim, jnp.bfloat16)
    assert jnp.allclose(out, ref_m, rtol=2e-2, atol=2e-2), \
        float(jnp.max(jnp.abs(out - ref_m)))

    # Fidelity check against the original full-f32 module semantics.
    ref_f = reference_forward_f32(src, dest, edge_attr, params)
    assert jnp.allclose(out, ref_f, rtol=1e-1, atol=1e-1), \
        float(jnp.max(jnp.abs(out - ref_f)))

    print("KERNEL_OK")
</pallas_src>

<mosaic_0001>
module attributes {stable_mosaic.version = 11 : i64} {
  func.func @edge_mlp_kernel(%arg0: i32, %arg1: memref<32x32xbf16, #tpu.memory_space<vmem>>, %arg2: memref<32x32xbf16, #tpu.memory_space<vmem>>, %arg3: memref<32x64xbf16, #tpu.memory_space<vmem>>, %arg4: memref<32x128xbf16, #tpu.memory_space<vmem>>, %arg5: memref<32x128xbf16, #tpu.memory_space<vmem>>, %arg6: memref<64x128xbf16, #tpu.memory_space<vmem>>, %arg7: memref<1x128xf32, #tpu.memory_space<vmem>>, %arg8: memref<128x128xbf16, #tpu.memory_space<vmem>>, %arg9: memref<1x128xf32, #tpu.memory_space<vmem>>, %arg10: memref<128x128xbf16, #tpu.memory_space<vmem>>, %arg11: memref<1x128xf32, #tpu.memory_space<vmem>>, %arg12: memref<128x128xf32, #tpu.memory_space<vmem>>, %arg13: memref<1x128xf32, #tpu.memory_space<vmem>>, %arg14: memref<1x128xf32, #tpu.memory_space<vmem>>, %arg15: memref<32x128xf32, #tpu.memory_space<vmem>>) attributes {dimension_semantics = [#tpu.dimension_semantics<parallel>], iteration_bounds = array<i64: 2>, scalar_prefetch = 0 : i64, scratch_operands = 0 : i64, tpu.core_type = #tpu.core_type<tc>, window_params = [{transform_indices = @transform_0, window_bounds = array<i64: 32, 32>}, {transform_indices = @transform_1, window_bounds = array<i64: 32, 32>}, {transform_indices = @transform_2, window_bounds = array<i64: 32, 64>}, {pipeline_mode = #tpu.pipeline_mode<synchronous>, transform_indices = @transform_3, window_bounds = array<i64: 32, 128>}, {pipeline_mode = #tpu.pipeline_mode<synchronous>, transform_indices = @transform_4, window_bounds = array<i64: 32, 128>}, {pipeline_mode = #tpu.pipeline_mode<synchronous>, transform_indices = @transform_5, window_bounds = array<i64: 64, 128>}, {pipeline_mode = #tpu.pipeline_mode<synchronous>, transform_indices = @transform_6, window_bounds = array<i64: 1, 128>}, {pipeline_mode = #tpu.pipeline_mode<synchronous>, transform_indices = @transform_7, window_bounds = array<i64: 128, 128>}, {pipeline_mode = #tpu.pipeline_mode<synchronous>, transform_indices = @transform_8, window_bounds = array<i64: 1, 128>}, {pipeline_mode = #tpu.pipeline_mode<synchronous>, transform_indices = @transform_9, window_bounds = array<i64: 128, 128>}, {pipeline_mode = #tpu.pipeline_mode<synchronous>, transform_indices = @transform_10, window_bounds = array<i64: 1, 128>}, {pipeline_mode = #tpu.pipeline_mode<synchronous>, transform_indices = @transform_11, window_bounds = array<i64: 128, 128>}, {pipeline_mode = #tpu.pipeline_mode<synchronous>, transform_indices = @transform_12, window_bounds = array<i64: 1, 128>}, {pipeline_mode = #tpu.pipeline_mode<synchronous>, transform_indices = @transform_13, window_bounds = array<i64: 1, 128>}, {transform_indices = @transform_14, window_bounds = array<i64: 32, 128>}]} {
    %c0 = arith.constant 0 : index
    %c0_0 = arith.constant 0 : index
    %0 = vector.load %arg1[%c0, %c0_0] : memref<32x32xbf16, #tpu.memory_space<vmem>>, vector<32x32xbf16>
    %c0_1 = arith.constant 0 : index
    %c0_2 = arith.constant 0 : index
    %1 = vector.load %arg4[%c0_1, %c0_2] : memref<32x128xbf16, #tpu.memory_space<vmem>>, vector<32x128xbf16>
    %cst = arith.constant dense<0.000000e+00> : vector<32x128xf32>
    %2 = tpu.matmul %0, %1, %cst {dimension_numbers = #tpu.dot_dimension_numbers<[1], [0], [0], [1], [0, 0, 1, 1], [], []>} : vector<32x32xbf16>, vector<32x128xbf16>, vector<32x128xf32> -> vector<32x128xf32>
    %c0_3 = arith.constant 0 : index
    %c0_4 = arith.constant 0 : index
    %3 = vector.load %arg2[%c0_3, %c0_4] : memref<32x32xbf16, #tpu.memory_space<vmem>>, vector<32x32xbf16>
    %c0_5 = arith.constant 0 : index
    %c0_6 = arith.constant 0 : index
    %4 = vector.load %arg5[%c0_5, %c0_6] : memref<32x128xbf16, #tpu.memory_space<vmem>>, vector<32x128xbf16>
    %cst_7 = arith.constant dense<0.000000e+00> : vector<32x128xf32>
    %5 = tpu.matmul %3, %4, %cst_7 {dimension_numbers = #tpu.dot_dimension_numbers<[1], [0], [0], [1], [0, 0, 1, 1], [], []>} : vector<32x32xbf16>, vector<32x128xbf16>, vector<32x128xf32> -> vector<32x128xf32>
    %6 = arith.addf %2, %5 : vector<32x128xf32>
    %c0_8 = arith.constant 0 : index
    %c0_9 = arith.constant 0 : index
    %7 = vector.load %arg3[%c0_8, %c0_9] : memref<32x64xbf16, #tpu.memory_space<vmem>>, vector<32x64xbf16>
    %c0_10 = arith.constant 0 : index
    %c0_11 = arith.constant 0 : index
    %8 = vector.load %arg6[%c0_10, %c0_11] : memref<64x128xbf16, #tpu.memory_space<vmem>>, vector<64x128xbf16>
    %cst_12 = arith.constant dense<0.000000e+00> : vector<32x128xf32>
    %9 = tpu.matmul %7, %8, %cst_12 {dimension_numbers = #tpu.dot_dimension_numbers<[1], [0], [0], [1], [0, 0, 1, 1], [], []>} : vector<32x64xbf16>, vector<64x128xbf16>, vector<32x128xf32> -> vector<32x128xf32>
    %10 = arith.addf %6, %9 : vector<32x128xf32>
    %c0_13 = arith.constant 0 : index
    %c0_14 = arith.constant 0 : index
    %11 = vector.load %arg7[%c0_13, %c0_14] : memref<1x128xf32, #tpu.memory_space<vmem>>, vector<1x128xf32>
    %12 = vector.broadcast %11 : vector<1x128xf32> to vector<32x128xf32>
    %13 = arith.addf %10, %12 : vector<32x128xf32>
    %cst_15 = arith.constant 0.000000e+00 : f32
    %14 = vector.broadcast %cst_15 : f32 to vector<32x128xf32>
    %15 = arith.cmpf ogt, %13, %14 : vector<32x128xf32>
    %cst_16 = arith.constant 0.00999999977 : f32
    %16 = vector.broadcast %cst_16 : f32 to vector<32x128xf32>
    %17 = arith.mulf %16, %13 : vector<32x128xf32>
    %18 = arith.select %15, %13, %17 : vector<32x128xi1>, vector<32x128xf32>
    %19 = arith.truncf %18 : vector<32x128xf32> to vector<32x128xbf16>
    %c0_17 = arith.constant 0 : index
    %c0_18 = arith.constant 0 : index
    %20 = vector.load %arg8[%c0_17, %c0_18] : memref<128x128xbf16, #tpu.memory_space<vmem>>, vector<128x128xbf16>
    %cst_19 = arith.constant dense<0.000000e+00> : vector<32x128xf32>
    %21 = tpu.matmul %19, %20, %cst_19 {dimension_numbers = #tpu.dot_dimension_numbers<[1], [0], [0], [1], [0, 0, 1, 1], [], []>} : vector<32x128xbf16>, vector<128x128xbf16>, vector<32x128xf32> -> vector<32x128xf32>
    %c0_20 = arith.constant 0 : index
    %c0_21 = arith.constant 0 : index
    %22 = vector.load %arg9[%c0_20, %c0_21] : memref<1x128xf32, #tpu.memory_space<vmem>>, vector<1x128xf32>
    %23 = vector.broadcast %22 : vector<1x128xf32> to vector<32x128xf32>
    %24 = arith.addf %21, %23 : vector<32x128xf32>
    %cst_22 = arith.constant 0.000000e+00 : f32
    %25 = vector.broadcast %cst_22 : f32 to vector<32x128xf32>
    %26 = arith.cmpf ogt, %24, %25 : vector<32x128xf32>
    %cst_23 = arith.constant 0.00999999977 : f32
    %27 = vector.broadcast %cst_23 : f32 to vector<32x128xf32>
    %28 = arith.mulf %27, %24 : vector<32x128xf32>
    %29 = arith.select %26, %24, %28 : vector<32x128xi1>, vector<32x128xf32>
    %30 = arith.truncf %29 : vector<32x128xf32> to vector<32x128xbf16>
    %c0_24 = arith.constant 0 : index
    %c0_25 = arith.constant 0 : index
    %31 = vector.load %arg10[%c0_24, %c0_25] : memref<128x128xbf16, #tpu.memory_space<vmem>>, vector<128x128xbf16>
    %cst_26 = arith.constant dense<0.000000e+00> : vector<32x128xf32>
    %32 = tpu.matmul %30, %31, %cst_26 {dimension_numbers = #tpu.dot_dimension_numbers<[1], [0], [0], [1], [0, 0, 1, 1], [], []>} : vector<32x128xbf16>, vector<128x128xbf16>, vector<32x128xf32> -> vector<32x128xf32>
    %c0_27 = arith.constant 0 : index
    %c0_28 = arith.constant 0 : index
    %33 = vector.load %arg11[%c0_27, %c0_28] : memref<1x128xf32, #tpu.memory_space<vmem>>, vector<1x128xf32>
    %34 = vector.broadcast %33 : vector<1x128xf32> to vector<32x128xf32>
    %35 = arith.addf %32, %34 : vector<32x128xf32>
    %cst_29 = arith.constant 0.000000e+00 : f32
    %36 = vector.broadcast %cst_29 : f32 to vector<32x128xf32>
    %37 = arith.cmpf ogt, %35, %36 : vector<32x128xf32>
    %cst_30 = arith.constant 0.00999999977 : f32
    %38 = vector.broadcast %cst_30 : f32 to vector<32x128xf32>
    %39 = arith.mulf %38, %35 : vector<32x128xf32>
    %40 = arith.select %37, %35, %39 : vector<32x128xi1>, vector<32x128xf32>
    %c0_31 = arith.constant 0 : index
    %c0_32 = arith.constant 0 : index
    %41 = vector.load %arg12[%c0_31, %c0_32] : memref<128x128xf32, #tpu.memory_space<vmem>>, vector<128x128xf32>
    %cst_33 = arith.constant dense<0.000000e+00> : vector<32x128xf32>
    %42 = tpu.matmul %40, %41, %cst_33 {dimension_numbers = #tpu.dot_dimension_numbers<[1], [0], [0], [1], [0, 0, 1, 1], [], []>} : vector<32x128xf32>, vector<128x128xf32>, vector<32x128xf32> -> vector<32x128xf32>
    %43 = arith.subf %40, %42 : vector<32x128xf32>
    %44 = arith.mulf %43, %43 : vector<32x128xf32>
    %c0_34 = arith.constant 0 : index
    %c0_35 = arith.constant 0 : index
    %45 = vector.load %arg12[%c0_34, %c0_35] : memref<128x128xf32, #tpu.memory_space<vmem>>, vector<128x128xf32>
    %cst_36 = arith.constant dense<0.000000e+00> : vector<32x128xf32>
    %46 = tpu.matmul %44, %45, %cst_36 {dimension_numbers = #tpu.dot_dimension_numbers<[1], [0], [0], [1], [0, 0, 1, 1], [], []>} : vector<32x128xf32>, vector<128x128xf32>, vector<32x128xf32> -> vector<32x128xf32>
    %cst_37 = arith.constant 9.99999974E-6 : f32
    %47 = vector.broadcast %cst_37 : f32 to vector<32x128xf32>
    %48 = arith.addf %46, %47 : vector<32x128xf32>
    %49 = math.rsqrt %48 : vector<32x128xf32>
    %50 = arith.mulf %43, %49 : vector<32x128xf32>
    %c0_38 = arith.constant 0 : index
    %c0_39 = arith.constant 0 : index
    %51 = vector.load %arg13[%c0_38, %c0_39] : memref<1x128xf32, #tpu.memory_space<vmem>>, vector<1x128xf32>
    %52 = vector.broadcast %51 : vector<1x128xf32> to vector<32x128xf32>
    %53 = arith.mulf %50, %52 : vector<32x128xf32>
    %c0_40 = arith.constant 0 : index
    %c0_41 = arith.constant 0 : index
    %54 = vector.load %arg14[%c0_40, %c0_41] : memref<1x128xf32, #tpu.memory_space<vmem>>, vector<1x128xf32>
    %55 = vector.broadcast %54 : vector<1x128xf32> to vector<32x128xf32>
    %56 = arith.addf %53, %55 : vector<32x128xf32>
    %c0_42 = arith.constant 0 : index
    %c0_43 = arith.constant 0 : index
    %57 = vector.load %arg15[%c0_42, %c0_43] : memref<32x128xf32, #tpu.memory_space<vmem>>, vector<32x128xf32>
    tpu.vector_store %arg15[%c0_42, %c0_43], %56 {strides = array<i32>} : memref<32x128xf32, #tpu.memory_space<vmem>>, vector<32x128xf32>,
    return
  }
  func.func @transform_0(%arg0: i32) -> (i32, i32) {
    %c0_i32 = arith.constant 0 : i32
    %c0_i32_0 = arith.constant 0 : i32
    return %arg0, %c0_i32 : i32, i32
  }
  func.func @transform_1(%arg0: i32) -> (i32, i32) {
    %c0_i32 = arith.constant 0 : i32
    %c0_i32_0 = arith.constant 0 : i32
    return %arg0, %c0_i32 : i32, i32
  }
  func.func @transform_2(%arg0: i32) -> (i32, i32) {
    %c0_i32 = arith.constant 0 : i32
    %c0_i32_0 = arith.constant 0 : i32
    return %arg0, %c0_i32 : i32, i32
  }
  func.func @transform_3(%arg0: i32) -> (i32, i32) {
    %c0_i32 = arith.constant 0 : i32
    %c0_i32_0 = arith.constant 0 : i32
    %c0_i32_1 = arith.constant 0 : i32
    return %c0_i32, %c0_i32_0 : i32, i32
  }
  func.func @transform_4(%arg0: i32) -> (i32, i32) {
    %c0_i32 = arith.constant 0 : i32
    %c0_i32_0 = arith.constant 0 : i32
    %c0_i32_1 = arith.constant 0 : i32
    return %c0_i32, %c0_i32_0 : i32, i32
  }
  func.func @transform_5(%arg0: i32) -> (i32, i32) {
    %c0_i32 = arith.constant 0 : i32
    %c0_i32_0 = arith.constant 0 : i32
    %c0_i32_1 = arith.constant 0 : i32
    return %c0_i32, %c0_i32_0 : i32, i32
  }
  func.func @transform_6(%arg0: i32) -> (i32, i32) {
    %c0_i32 = arith.constant 0 : i32
    %c0_i32_0 = arith.constant 0 : i32
    %c0_i32_1 = arith.constant 0 : i32
    return %c0_i32, %c0_i32_0 : i32, i32
  }
  func.func @transform_7(%arg0: i32) -> (i32, i32) {
    %c0_i32 = arith.constant 0 : i32
    %c0_i32_0 = arith.constant 0 : i32
    %c0_i32_1 = arith.constant 0 : i32
    return %c0_i32, %c0_i32_0 : i32, i32
  }
  func.func @transform_8(%arg0: i32) -> (i32, i32) {
    %c0_i32 = arith.constant 0 : i32
    %c0_i32_0 = arith.constant 0 : i32
    %c0_i32_1 = arith.constant 0 : i32
    return %c0_i32, %c0_i32_0 : i32, i32
  }
  func.func @transform_9(%arg0: i32) -> (i32, i32) {
    %c0_i32 = arith.constant 0 : i32
    %c0_i32_0 = arith.constant 0 : i32
    %c0_i32_1 = arith.constant 0 : i32
    return %c0_i32, %c0_i32_0 : i32, i32
  }
  func.func @transform_10(%arg0: i32) -> (i32, i32) {
    %c0_i32 = arith.constant 0 : i32
    %c0_i32_0 = arith.constant 0 : i32
    %c0_i32_1 = arith.constant 0 : i32
    return %c0_i32, %c0_i32_0 : i32, i32
  }
  func.func @transform_11(%arg0: i32) -> (i32, i32) {
    %c0_i32 = arith.constant 0 : i32
    %c0_i32_0 = arith.constant 0 : i32
    %c0_i32_1 = arith.constant 0 : i32
    return %c0_i32, %c0_i32_0 : i32, i32
  }
  func.func @transform_12(%arg0: i32) -> (i32, i32) {
    %c0_i32 = arith.constant 0 : i32
    %c0_i32_0 = arith.constant 0 : i32
    %c0_i32_1 = arith.constant 0 : i32
    return %c0_i32, %c0_i32_0 : i32, i32
  }
  func.func @transform_13(%arg0: i32) -> (i32, i32) {
    %c0_i32 = arith.constant 0 : i32
    %c0_i32_0 = arith.constant 0 : i32
    %c0_i32_1 = arith.constant 0 : i32
    return %c0_i32, %c0_i32_0 : i32, i32
  }
  func.func @transform_14(%arg0: i32) -> (i32, i32) {
    %c0_i32 = arith.constant 0 : i32
    %c0_i32_0 = arith.constant 0 : i32
    return %arg0, %c0_i32 : i32, i32
  }
}

</mosaic_0001>

<llo_original>
// kernel: edge_model_forward.1
$region0: #{edge_model_forward.1}
  #allocation0 [shape = 'u32[]', space=smem, size = 0x4, offset = 0x4, fixed_abs, tag = 'smem constant byte address 0x4 - core index']
  #allocation1 [shape = 'u32[144,128]{1,0:T(1,128)}', space=vmem, size = 0x12000, scoped, tag = 'internal scratch']
  %s0 = inlined_call_operand.vmem [shape: bf16[64,32], index: 0, kind: input, shape index: {}]
  %s1 = inlined_call_operand.vmem [shape: bf16[64,32], index: 1, kind: input, shape index: {}]
  %s2 = inlined_call_operand.vmem [shape: bf16[64,64], index: 2, kind: input, shape index: {}]
  %s3 = inlined_call_operand.vmem [shape: bf16[32,128], index: 3, kind: input, shape index: {}]
  %s4 = inlined_call_operand.vmem [shape: bf16[32,128], index: 4, kind: input, shape index: {}]
  %s5 = inlined_call_operand.vmem [shape: bf16[64,128], index: 5, kind: input, shape index: {}]
  %s6 = inlined_call_operand.vmem [shape: f32[1,128], index: 6, kind: input, shape index: {}]
  %s7 = inlined_call_operand.vmem [shape: bf16[128,128], index: 7, kind: input, shape index: {}]
  %s8 = inlined_call_operand.vmem [shape: f32[1,128], index: 8, kind: input, shape index: {}]
  %s9 = inlined_call_operand.vmem [shape: bf16[128,128], index: 9, kind: input, shape index: {}]
  %s10 = inlined_call_operand.vmem [shape: f32[1,128], index: 10, kind: input, shape index: {}]
  %s11 = inlined_call_operand.vmem [shape: f32[128,128], index: 11, kind: input, shape index: {}]
  %s12 = inlined_call_operand.vmem [shape: f32[1,128], index: 12, kind: input, shape index: {}]
  %s13 = inlined_call_operand.vmem [shape: f32[1,128], index: 13, kind: input, shape index: {}]
  %s14 = inlined_call_operand.vmem [shape: f32[64,128], index: 14, kind: output, shape index: {}]
  %s15 = sld [smem:[#allocation0]]
  $region89: #{edge_model_forward.1} parent=0
    _
  %s17 = ssub.s32 1, %s15
  %s18 = scalar_select 0, %s17, %s15
  loop: start=0, step=1, limit=4
  $region2: #{edge_model_forward.1} parent=0 // loop_pre_header
    _
  $region3: #{edge_model_forward.1} parent=0 // loop_header
    %s20 = sphi 0, %s24
    %p21 = scmp.ge.s32.totalorder %s20, 4
    %s30 = sphi 0, %s32
    %s33 = sphi 0, %s30
    %s34 = sphi 0, %s33
    %s50 = sphi 0, %s34
    %s56 = sphi 0, %s58
    %s59 = sphi 0, %s56
    %s60 = sphi 0, %s59
    %s76 = sphi 0, %s60
    %s82 = sphi 0, %s84
    %s85 = sphi 0, %s82
    %s86 = sphi 0, %s85
    %s102 = sphi 0, %s86
    %s106 = sphi 0, %s106
    %s108 = sphi 0, %s106
    %s109 = sphi 0, %s108
    %s123 = sphi 0, %s109
    %s127 = sphi 0, %s127
    %s129 = sphi 0, %s127
    %s130 = sphi 0, %s129
    %s144 = sphi 0, %s130
    %s148 = sphi 0, %s148
    %s150 = sphi 0, %s148
    %s151 = sphi 0, %s150
    %s165 = sphi 0, %s151
    %s169 = sphi 0, %s169
    %s171 = sphi 0, %s169
    %s172 = sphi 0, %s171
    %s186 = sphi 0, %s172
    %s190 = sphi 0, %s190
    %s192 = sphi 0, %s190
    %s193 = sphi 0, %s192
    %s207 = sphi 0, %s193
    %s211 = sphi 0, %s211
    %s213 = sphi 0, %s211
    %s214 = sphi 0, %s213
    %s228 = sphi 0, %s214
    %s232 = sphi 0, %s232
    %s234 = sphi 0, %s232
    %s235 = sphi 0, %s234
    %s249 = sphi 0, %s235
    %s253 = sphi 0, %s253
    %s255 = sphi 0, %s253
    %s256 = sphi 0, %s255
    %s270 = sphi 0, %s256
    %s274 = sphi 0, %s274
    %s276 = sphi 0, %s274
    %s277 = sphi 0, %s276
    %s291 = sphi 0, %s277
    %s295 = sphi 0, %s295
    %s297 = sphi 0, %s295
    %s298 = sphi 0, %s297
    %s312 = sphi 0, %s298
    %s316 = sphi 0, %s316
    %s318 = sphi 0, %s316
    %s319 = sphi 0, %s318
    %s333 = sphi 0, %s319
    %s339 = sphi 0, %s341
    %s342 = sphi 0, %s339
    %s343 = sphi 0, %s342
    %s359 = sphi 0, %s343
  $region4: #{edge_model_forward.1} parent=0 // loop_header_branch
    %23 = sbr.rel (%p21) target = $region8
  $region5: #{edge_model_forward.1} parent=0 // loop_body
    %s25 = ssub.s32 %s20, 1
    %s26 = ssub.s32 %s20, 2
    %s27 = sadd.s32 %s20, 1
    %s28 = ssub.s32 %s20, %s27
    %p29 = scmp.eq.s32.totalorder %s28, 0
    %s31 = sadd.s32 %s30, 1
    %s32 = scalar_select %p29, %s30, %s31
    %p35 = pneg %p29
    %p36 = scmp.eq.s32.totalorder %s20, 1
    %p37 = por %p35, %p36
    %p38 = scmp.ne.s32.totalorder %s30, %s33
    %p39 = scmp.eq.s32.totalorder %s20, 0
    %p40 = por %p38, %p39
    %p41 = scmp.ne.s32.totalorder %s30, %s33
    %p42 = scmp.eq.s32.totalorder %s25, 1
    %p43 = por %p41, %p42
    %p44 = scmp.ne.s32.totalorder %s33, %s34
    %p45 = scmp.eq.s32.totalorder %s25, 0
    %p46 = por %p44, %p45
    %p47 = scmp.ne.s32.totalorder %s33, %s34
    %p48 = scmp.eq.s32.totalorder %s26, 1
    %p49 = por %p47, %p48
    %p51 = scmp.ne.s32.totalorder %s34, %s50
    %p52 = scmp.eq.s32.totalorder %s26, 0
    %p53 = por %p51, %p52
    %s54 = ssub.s32 %s20, %s27
    %p55 = scmp.eq.s32.totalorder %s54, 0
    %s57 = sadd.s32 %s56, 1
    %s58 = scalar_select %p55, %s56, %s57
    %p61 = pneg %p55
    %p62 = scmp.eq.s32.totalorder %s20, 1
    %p63 = por %p61, %p62
    %p64 = scmp.ne.s32.totalorder %s56, %s59
    %p65 = scmp.eq.s32.totalorder %s20, 0
    %p66 = por %p64, %p65
    %p67 = scmp.ne.s32.totalorder %s56, %s59
    %p68 = scmp.eq.s32.totalorder %s25, 1
    %p69 = por %p67, %p68
    %p70 = scmp.ne.s32.totalorder %s59, %s60
    %p71 = scmp.eq.s32.totalorder %s25, 0
    %p72 = por %p70, %p71
    %p73 = scmp.ne.s32.totalorder %s59, %s60
    %p74 = scmp.eq.s32.totalorder %s26, 1
    %p75 = por %p73, %p74
    %p77 = scmp.ne.s32.totalorder %s60, %s76
    %p78 = scmp.eq.s32.totalorder %s26, 0
    %p79 = por %p77, %p78
    %s80 = ssub.s32 %s20, %s27
    %p81 = scmp.eq.s32.totalorder %s80, 0
    %s83 = sadd.s32 %s82, 1
    %s84 = scalar_select %p81, %s82, %s83
    %p87 = pneg %p81
    %p88 = scmp.eq.s32.totalorder %s20, 1
    %p89 = por %p87, %p88
    %p90 = scmp.ne.s32.totalorder %s82, %s85
    %p91 = scmp.eq.s32.totalorder %s20, 0
    %p92 = por %p90, %p91
    %p93 = scmp.ne.s32.totalorder %s82, %s85
    %p94 = scmp.eq.s32.totalorder %s25, 1
    %p95 = por %p93, %p94
    %p96 = scmp.ne.s32.totalorder %s85, %s86
    %p97 = scmp.eq.s32.totalorder %s25, 0
    %p98 = por %p96, %p97
    %p99 = scmp.ne.s32.totalorder %s85, %s86
    %p100 = scmp.eq.s32.totalorder %s26, 1
    %p101 = por %p99, %p100
    %p103 = scmp.ne.s32.totalorder %s86, %s102
    %p104 = scmp.eq.s32.totalorder %s26, 0
    %p105 = por %p103, %p104
    %s107 = sadd.s32 %s106, 1
    %p110 = scmp.eq.s32.totalorder %s20, 1
    %p111 = scmp.ne.s32.totalorder %s106, %s108
    %p112 = scmp.eq.s32.totalorder %s20, 0
    %p113 = por %p111, %p112
    %p114 = scmp.ne.s32.totalorder %s106, %s108
    %p115 = scmp.eq.s32.totalorder %s25, 1
    %p116 = por %p114, %p115
    %p117 = scmp.ne.s32.totalorder %s108, %s109
    %p118 = scmp.eq.s32.totalorder %s25, 0
    %p119 = por %p117, %p118
    %p120 = scmp.ne.s32.totalorder %s108, %s109
    %p121 = scmp.eq.s32.totalorder %s26, 1
    %p122 = por %p120, %p121
    %p124 = scmp.ne.s32.totalorder %s109, %s123
    %p125 = scmp.eq.s32.totalorder %s26, 0
    %p126 = por %p124, %p125
    %s128 = sadd.s32 %s127, 1
    %p131 = scmp.eq.s32.totalorder %s20, 1
    %p132 = scmp.ne.s32.totalorder %s127, %s129
    %p133 = scmp.eq.s32.totalorder %s20, 0
    %p134 = por %p132, %p133
    %p135 = scmp.ne.s32.totalorder %s127, %s129
    %p136 = scmp.eq.s32.totalorder %s25, 1
    %p137 = por %p135, %p136
    %p138 = scmp.ne.s32.totalorder %s129, %s130
    %p139 = scmp.eq.s32.totalorder %s25, 0
    %p140 = por %p138, %p139
    %p141 = scmp.ne.s32.totalorder %s129, %s130
    %p142 = scmp.eq.s32.totalorder %s26, 1
    %p143 = por %p141, %p142
    %p145 = scmp.ne.s32.totalorder %s130, %s144
    %p146 = scmp.eq.s32.totalorder %s26, 0
    %p147 = por %p145, %p146
    %s149 = sadd.s32 %s148, 1
    %p152 = scmp.eq.s32.totalorder %s20, 1
    %p153 = scmp.ne.s32.totalorder %s148, %s150
    %p154 = scmp.eq.s32.totalorder %s20, 0
    %p155 = por %p153, %p154
    %p156 = scmp.ne.s32.totalorder %s148, %s150
    %p157 = scmp.eq.s32.totalorder %s25, 1
    %p158 = por %p156, %p157
    %p159 = scmp.ne.s32.totalorder %s150, %s151
    %p160 = scmp.eq.s32.totalorder %s25, 0
    %p161 = por %p159, %p160
    %p162 = scmp.ne.s32.totalorder %s150, %s151
    %p163 = scmp.eq.s32.totalorder %s26, 1
    %p164 = por %p162, %p163
    %p166 = scmp.ne.s32.totalorder %s151, %s165
    %p167 = scmp.eq.s32.totalorder %s26, 0
    %p168 = por %p166, %p167
    %s170 = sadd.s32 %s169, 1
    %p173 = scmp.eq.s32.totalorder %s20, 1
    %p174 = scmp.ne.s32.totalorder %s169, %s171
    %p175 = scmp.eq.s32.totalorder %s20, 0
    %p176 = por %p174, %p175
    %p177 = scmp.ne.s32.totalorder %s169, %s171
    %p178 = scmp.eq.s32.totalorder %s25, 1
    %p179 = por %p177, %p178
    %p180 = scmp.ne.s32.totalorder %s171, %s172
    %p181 = scmp.eq.s32.totalorder %s25, 0
    %p182 = por %p180, %p181
    %p183 = scmp.ne.s32.totalorder %s171, %s172
    %p184 = scmp.eq.s32.totalorder %s26, 1
    %p185 = por %p183, %p184
    %p187 = scmp.ne.s32.totalorder %s172, %s186
    %p188 = scmp.eq.s32.totalorder %s26, 0
    %p189 = por %p187, %p188
    %s191 = sadd.s32 %s190, 1
    %p194 = scmp.eq.s32.totalorder %s20, 1
    %p195 = scmp.ne.s32.totalorder %s190, %s192
    %p196 = scmp.eq.s32.totalorder %s20, 0
    %p197 = por %p195, %p196
    %p198 = scmp.ne.s32.totalorder %s190, %s192
    %p199 = scmp.eq.s32.totalorder %s25, 1
    %p200 = por %p198, %p199
    %p201 = scmp.ne.s32.totalorder %s192, %s193
    %p202 = scmp.eq.s32.totalorder %s25, 0
    %p203 = por %p201, %p202
    %p204 = scmp.ne.s32.totalorder %s192, %s193
    %p205 = scmp.eq.s32.totalorder %s26, 1
    %p206 = por %p204, %p205
    %p208 = scmp.ne.s32.totalorder %s193, %s207
    %p209 = scmp.eq.s32.totalorder %s26, 0
    %p210 = por %p208, %p209
    %s212 = sadd.s32 %s211, 1
    %p215 = scmp.eq.s32.totalorder %s20, 1
    %p216 = scmp.ne.s32.totalorder %s211, %s213
    %p217 = scmp.eq.s32.totalorder %s20, 0
    %p218 = por %p216, %p217
    %p219 = scmp.ne.s32.totalorder %s211, %s213
    %p220 = scmp.eq.s32.totalorder %s25, 1
    %p221 = por %p219, %p220
    %p222 = scmp.ne.s32.totalorder %s213, %s214
    %p223 = scmp.eq.s32.totalorder %s25, 0
    %p224 = por %p222, %p223
    %p225 = scmp.ne.s32.totalorder %s213, %s214
    %p226 = scmp.eq.s32.totalorder %s26, 1
    %p227 = por %p225, %p226
    %p229 = scmp.ne.s32.totalorder %s214, %s228
    %p230 = scmp.eq.s32.totalorder %s26, 0
    %p231 = por %p229, %p230
    %s233 = sadd.s32 %s232, 1
    %p236 = scmp.eq.s32.totalorder %s20, 1
    %p237 = scmp.ne.s32.totalorder %s232, %s234
    %p238 = scmp.eq.s32.totalorder %s20, 0
    %p239 = por %p237, %p238
    %p240 = scmp.ne.s32.totalorder %s232, %s234
    %p241 = scmp.eq.s32.totalorder %s25, 1
    %p242 = por %p240, %p241
    %p243 = scmp.ne.s32.totalorder %s234, %s235
    %p244 = scmp.eq.s32.totalorder %s25, 0
    %p245 = por %p243, %p244
    %p246 = scmp.ne.s32.totalorder %s234, %s235
    %p247 = scmp.eq.s32.totalorder %s26, 1
    %p248 = por %p246, %p247
    %p250 = scmp.ne.s32.totalorder %s235, %s249
    %p251 = scmp.eq.s32.totalorder %s26, 0
    %p252 = por %p250, %p251
    %s254 = sadd.s32 %s253, 1
    %p257 = scmp.eq.s32.totalorder %s20, 1
    %p258 = scmp.ne.s32.totalorder %s253, %s255
    %p259 = scmp.eq.s32.totalorder %s20, 0
    %p260 = por %p258, %p259
    %p261 = scmp.ne.s32.totalorder %s253, %s255
    %p262 = scmp.eq.s32.totalorder %s25, 1
    %p263 = por %p261, %p262
    %p264 = scmp.ne.s32.totalorder %s255, %s256
    %p265 = scmp.eq.s32.totalorder %s25, 0
    %p266 = por %p264, %p265
    %p267 = scmp.ne.s32.totalorder %s255, %s256
    %p268 = scmp.eq.s32.totalorder %s26, 1
    %p269 = por %p267, %p268
    %p271 = scmp.ne.s32.totalorder %s256, %s270
    %p272 = scmp.eq.s32.totalorder %s26, 0
    %p273 = por %p271, %p272
    %s275 = sadd.s32 %s274, 1
    %p278 = scmp.eq.s32.totalorder %s20, 1
    %p279 = scmp.ne.s32.totalorder %s274, %s276
    %p280 = scmp.eq.s32.totalorder %s20, 0
    %p281 = por %p279, %p280
    %p282 = scmp.ne.s32.totalorder %s274, %s276
    %p283 = scmp.eq.s32.totalorder %s25, 1
    %p284 = por %p282, %p283
    %p285 = scmp.ne.s32.totalorder %s276, %s277
    %p286 = scmp.eq.s32.totalorder %s25, 0
    %p287 = por %p285, %p286
    %p288 = scmp.ne.s32.totalorder %s276, %s277
    %p289 = scmp.eq.s32.totalorder %s26, 1
    %p290 = por %p288, %p289
    %p292 = scmp.ne.s32.totalorder %s277, %s291
    %p293 = scmp.eq.s32.totalorder %s26, 0
    %p294 = por %p292, %p293
    %s296 = sadd.s32 %s295, 1
    %p299 = scmp.eq.s32.totalorder %s20, 1
    %p300 = scmp.ne.s32.totalorder %s295, %s297
    %p301 = scmp.eq.s32.totalorder %s20, 0
    %p302 = por %p300, %p301
    %p303 = scmp.ne.s32.totalorder %s295, %s297
    %p304 = scmp.eq.s32.totalorder %s25, 1
    %p305 = por %p303, %p304
    %p306 = scmp.ne.s32.totalorder %s297, %s298
    %p307 = scmp.eq.s32.totalorder %s25, 0
    %p308 = por %p306, %p307
    %p309 = scmp.ne.s32.totalorder %s297, %s298
    %p310 = scmp.eq.s32.totalorder %s26, 1
    %p311 = por %p309, %p310
    %p313 = scmp.ne.s32.totalorder %s298, %s312
    %p314 = scmp.eq.s32.totalorder %s26, 0
    %p315 = por %p313, %p314
    %s317 = sadd.s32 %s316, 1
    %p320 = scmp.eq.s32.totalorder %s20, 1
    %p321 = scmp.ne.s32.totalorder %s316, %s318
    %p322 = scmp.eq.s32.totalorder %s20, 0
    %p323 = por %p321, %p322
    %p324 = scmp.ne.s32.totalorder %s316, %s318
    %p325 = scmp.eq.s32.totalorder %s25, 1
    %p326 = por %p324, %p325
    %p327 = scmp.ne.s32.totalorder %s318, %s319
    %p328 = scmp.eq.s32.totalorder %s25, 0
    %p329 = por %p327, %p328
    %p330 = scmp.ne.s32.totalorder %s318, %s319
    %p331 = scmp.eq.s32.totalorder %s26, 1
    %p332 = por %p330, %p331
    %p334 = scmp.ne.s32.totalorder %s319, %s333
    %p335 = scmp.eq.s32.totalorder %s26, 0
    %p336 = por %p334, %p335
    %s337 = ssub.s32 %s20, %s27
    %p338 = scmp.eq.s32.totalorder %s337, 0
    %s340 = sadd.s32 %s339, 1
    %s341 = scalar_select %p338, %s339, %s340
    %p344 = pneg %p338
    %p345 = scmp.eq.s32.totalorder %s20, 1
    %p346 = por %p344, %p345
    %p347 = scmp.ne.s32.totalorder %s339, %s342
    %p348 = scmp.eq.s32.totalorder %s20, 0
    %p349 = por %p347, %p348
    %p350 = scmp.ne.s32.totalorder %s339, %s342
    %p351 = scmp.eq.s32.totalorder %s25, 1
    %p352 = por %p350, %p351
    %p353 = scmp.ne.s32.totalorder %s342, %s343
    %p354 = scmp.eq.s32.totalorder %s25, 0
    %p355 = por %p353, %p354
    %p356 = scmp.ne.s32.totalorder %s342, %s343
    %p357 = scmp.eq.s32.totalorder %s26, 1
    %p358 = por %p356, %p357
    %p360 = scmp.ne.s32.totalorder %s343, %s359
    %p361 = scmp.eq.s32.totalorder %s26, 0
    %p362 = por %p360, %p361
    %p363 = scmp.le.s32.totalorder 1, %s20
    %p364 = scmp.lt.s32.totalorder %s20, 3
    %p365 = pnand %p363, %p364
    %p366 = pneg %p365
    // Predicated region
    $region9: #{edge_model_forward.1} parent=5 // pred_check
      _
    $region10: #{edge_model_forward.1} parent=5 // pred_check_branch
      %368 = sbr.rel (%p365) target = $region12
    $region11: #{edge_model_forward.1} parent=5 // pred_region
      %s369 = ssub.s32 %s20, 1
      // Predicated region
      $region13: #{edge_model_forward.1} parent=11 // pred_check
        %p370 = pneg %p119
      $region14: #{edge_model_forward.1} parent=11 // pred_check_branch
        %372 = sbr.rel (%p370) target = $region16
      $region15: #{edge_model_forward.1} parent=11 // pred_region
        _
      $region16: #{edge_model_forward.1} parent=11 // pred_fallthru
        _
      // Predicated region
      $region17: #{edge_model_forward.1} parent=11 // pred_check
        %p373 = pneg %p140
      $region18: #{edge_model_forward.1} parent=11 // pred_check_branch
        %375 = sbr.rel (%p373) target = $region20
      $region19: #{edge_model_forward.1} parent=11 // pred_region
        _
      $region20: #{edge_model_forward.1} parent=11 // pred_fallthru
        _
      // Predicated region
      $region21: #{edge_model_forward.1} parent=11 // pred_check
        %p376 = pneg %p161
      $region22: #{edge_model_forward.1} parent=11 // pred_check_branch
        %378 = sbr.rel (%p376) target = $region24
      $region23: #{edge_model_forward.1} parent=11 // pred_region
        _
      $region24: #{edge_model_forward.1} parent=11 // pred_fallthru
        _
      // Predicated region
      $region25: #{edge_model_forward.1} parent=11 // pred_check
        %p379 = pneg %p182
      $region26: #{edge_model_forward.1} parent=11 // pred_check_branch
        %381 = sbr.rel (%p379) target = $region28
      $region27: #{edge_model_forward.1} parent=11 // pred_region
        _
      $region28: #{edge_model_forward.1} parent=11 // pred_fallthru
        _
      // Predicated region
      $region29: #{edge_model_forward.1} parent=11 // pred_check
        %p382 = pneg %p203
      $region30: #{edge_model_forward.1} parent=11 // pred_check_branch
        %384 = sbr.rel (%p382) target = $region32
      $region31: #{edge_model_forward.1} parent=11 // pred_region
        _
      $region32: #{edge_model_forward.1} parent=11 // pred_fallthru
        _
      // Predicated region
      $region33: #{edge_model_forward.1} parent=11 // pred_check
        %p385 = pneg %p224
      $region34: #{edge_model_forward.1} parent=11 // pred_check_branch
        %387 = sbr.rel (%p385) target = $region36
      $region35: #{edge_model_forward.1} parent=11 // pred_region
        _
      $region36: #{edge_model_forward.1} parent=11 // pred_fallthru
        _
      // Predicated region
      $region37: #{edge_model_forward.1} parent=11 // pred_check
        %p388 = pneg %p245
      $region38: #{edge_model_forward.1} parent=11 // pred_check_branch
        %390 = sbr.rel (%p388) target = $region40
      $region39: #{edge_model_forward.1} parent=11 // pred_region
        _
      $region40: #{edge_model_forward.1} parent=11 // pred_fallthru
        _
      // Predicated region
      $region41: #{edge_model_forward.1} parent=11 // pred_check
        %p391 = pneg %p266
      $region42: #{edge_model_forward.1} parent=11 // pred_check_branch
        %393 = sbr.rel (%p391) target = $region44
      $region43: #{edge_model_forward.1} parent=11 // pred_region
        _
      $region44: #{edge_model_forward.1} parent=11 // pred_fallthru
        _
      // Predicated region
      $region45: #{edge_model_forward.1} parent=11 // pred_check
        %p394 = pneg %p287
      $region46: #{edge_model_forward.1} parent=11 // pred_check_branch
        %396 = sbr.rel (%p394) target = $region48
      $region47: #{edge_model_forward.1} parent=11 // pred_region
        _
      $region48: #{edge_model_forward.1} parent=11 // pred_fallthru
        _
      // Predicated region
      $region49: #{edge_model_forward.1} parent=11 // pred_check
        %p397 = pneg %p308
      $region50: #{edge_model_forward.1} parent=11 // pred_check_branch
        %399 = sbr.rel (%p397) target = $region52
      $region51: #{edge_model_forward.1} parent=11 // pred_region
        _
      $region52: #{edge_model_forward.1} parent=11 // pred_fallthru
        _
      // Predicated region
      $region53: #{edge_model_forward.1} parent=11 // pred_check
        %p400 = pneg %p329
      $region54: #{edge_model_forward.1} parent=11 // pred_check_branch
        %402 = sbr.rel (%p400) target = $region56
      $region55: #{edge_model_forward.1} parent=11 // pred_region
        _
      $region56: #{edge_model_forward.1} parent=11 // pred_fallthru
        _
    $region12: #{edge_model_forward.1} parent=5 // pred_fallthru
      _
    %p403 = scmp.lt.s32.totalorder %s20, 2
    // Predicated region
    $region57: #{edge_model_forward.1} parent=5 // pred_check
      %p404 = pneg %p403
    $region58: #{edge_model_forward.1} parent=5 // pred_check_branch
      %406 = sbr.rel (%p404) target = $region60
    $region59: #{edge_model_forward.1} parent=5 // pred_region
      // Predicated region
      $region61: #{edge_model_forward.1} parent=59 // pred_check
        %p407 = pneg %p40
      $region62: #{edge_model_forward.1} parent=59 // pred_check_branch
        %409 = sbr.rel (%p407) target = $region64
      $region63: #{edge_model_forward.1} parent=59 // pred_region
        %s410 = smul.u32 4, %s20
        %p411 = scmp.lt.s32.totalorder %s410, 7
        %s412 = scalar_select %p411, %s410, 7
        %s413 = smul.addr %s412, 4
        %s414 = scalar_lea.vmem %s0, %s413
        %s415 = smul.u32 4, %s20
      $region64: #{edge_model_forward.1} parent=59 // pred_fallthru
        _
      // Predicated region
      $region65: #{edge_model_forward.1} parent=59 // pred_check
        %p416 = pneg %p66
      $region66: #{edge_model_forward.1} parent=59 // pred_check_branch
        %418 = sbr.rel (%p416) target = $region68
      $region67: #{edge_model_forward.1} parent=59 // pred_region
        %s419 = smul.u32 4, %s20
        %p420 = scmp.lt.s32.totalorder %s419, 7
        %s421 = scalar_select %p420, %s419, 7
        %s422 = smul.addr %s421, 4
        %s423 = scalar_lea.vmem %s1, %s422
        %s424 = smul.u32 4, %s20
      $region68: #{edge_model_forward.1} parent=59 // pred_fallthru
        _
      // Predicated region
      $region69: #{edge_model_forward.1} parent=59 // pred_check
        %p425 = pneg %p92
      $region70: #{edge_model_forward.1} parent=59 // pred_check_branch
        %427 = sbr.rel (%p425) target = $region72
      $region71: #{edge_model_forward.1} parent=59 // pred_region
        %s428 = smul.u32 4, %s20
        %p429 = scmp.lt.s32.totalorder %s428, 7
        %s430 = scalar_select %p429, %s428, 7
        %s431 = smul.addr %s430, 4
        %s432 = scalar_lea.vmem %s2, %s431
        %s433 = smul.u32 4, %s20
      $region72: #{edge_model_forward.1} parent=59 // pred_fallthru
        _
    $region60: #{edge_model_forward.1} parent=5 // pred_fallthru
      _
    %p434 = scmp.le.s32.totalorder 1, %s20
    %p435 = scmp.lt.s32.totalorder %s20, 3
    %p436 = pnand %p434, %p435
    %p437 = pneg %p436
    // Predicated region
    $region73: #{edge_model_forward.1} parent=5 // pred_check
      _
    $region74: #{edge_model_forward.1} parent=5 // pred_check_branch
      %439 = sbr.rel (%p436) target = $region76
    $region75: #{edge_model_forward.1} parent=5 // pred_region
      %s440 = ssub.s32 %s20, 1
      %s441 = smul.u32 4, %s25
      %p442 = scmp.lt.s32.totalorder %s441, 7
      %s443 = scalar_select %p442, %s441, 7
      %s444 = smul.addr %s443, 4
      %s445 = scalar_lea.vmem %s0, %s444
      %p446 = pneg %p46
      %p447 = pneg %p43
      %s448 = smul.u32 4, %s25
      %p449 = scmp.lt.s32.totalorder %s448, 7
      %s450 = scalar_select %p449, %s448, 7
      %s451 = smul.addr %s450, 4
      %s452 = scalar_lea.vmem %s1, %s451
      %p453 = pneg %p72
      %p454 = pneg %p69
      %s455 = smul.u32 4, %s25
      %p456 = scmp.lt.s32.totalorder %s455, 7
      %s457 = scalar_select %p456, %s455, 7
      %s458 = smul.addr %s457, 4
      %s459 = scalar_lea.vmem %s2, %s458
      %p460 = pneg %p98
      %p461 = pneg %p95
      %p462 = pneg %p119
      %p463 = pneg %p116
      %p464 = pneg %p140
      %p465 = pneg %p137
      %p466 = pneg %p161
      %p467 = pneg %p158
      %p468 = pneg %p182
      %p469 = pneg %p179
      %p470 = pneg %p203
      %p471 = pneg %p200
      %p472 = pneg %p224
      %p473 = pneg %p221
      %p474 = pneg %p245
      %p475 = pneg %p242
      %p476 = pneg %p266
      %p477 = pneg %p263
      %p478 = pneg %p287
      %p479 = pneg %p284
      %p480 = pneg %p308
      %p481 = pneg %p305
      %p482 = pneg %p329
      %p483 = pneg %p326
      %p484 = pneg %p355
      %p485 = pneg %p352
      %s486 = smul.u32 4, %s25
      %p487 = scmp.lt.s32.totalorder %s486, 7
      %s488 = scalar_select %p487, %s486, 7
      %s489 = smul.addr %s488, 8
      %s490 = scalar_lea.vmem %s14, %s489
      %s491 = smul.u32 4, %s25
      %p492 = scmp.lt.s32.totalorder %s491, 7
      %s493 = scalar_select %p492, %s491, 7
      %s494 = smul.addr %s493, 4
      %s495 = scalar_lea.vmem %s0, %s494
      %s496 = smul.u32 4, %s25
      %s497 = smul.u32 4, %s25
      %p498 = scmp.lt.s32.totalorder %s497, 7
      %s499 = scalar_select %p498, %s497, 7
      %s500 = smul.addr %s499, 4
      %s501 = scalar_lea.vmem %s1, %s500
      %s502 = smul.u32 4, %s25
      %s503 = smul.u32 4, %s25
      %p504 = scmp.lt.s32.totalorder %s503, 7
      %s505 = scalar_select %p504, %s503, 7
      %s506 = smul.addr %s505, 4
      %s507 = scalar_lea.vmem %s2, %s506
      %s508 = smul.u32 4, %s25
      %s509 = smul.u32 4, %s25
      %p510 = scmp.lt.s32.totalorder %s509, 7
      %s511 = scalar_select %p510, %s509, 7
      %s512 = smul.addr %s511, 8
      %s513 = scalar_lea.vmem %s14, %s512
      %s514 = smul.u32 4, %s25
      %v516 = vld [vmem:[%s495] sm:$0xf]
      %v517 = vld [vmem:[%s495 + $0x4] sm:$0xf]
      %v518 = vld [vmem:[%s495 + $0x8] sm:$0xf]
      %v519 = vld [vmem:[%s495 + $0xc] sm:$0xf]
      %v520 = vld [vmem:[%s3] sm:$0xf]
      %v521 = vld [vmem:[%s3 + $0x4] sm:$0xf]
      %v522 = vld [vmem:[%s3 + $0x8] sm:$0xf]
      %v523 = vld [vmem:[%s3 + $0xc] sm:$0xf]
      %v524 = vld [vmem:[%s501] sm:$0xf]
      %v525 = vld [vmem:[%s501 + $0x4] sm:$0xf]
      %v526 = vld [vmem:[%s501 + $0x8] sm:$0xf]
      %v527 = vld [vmem:[%s501 + $0xc] sm:$0xf]
      %v528 = vld [vmem:[%s4] sm:$0xf]
      %v529 = vld [vmem:[%s4 + $0x4] sm:$0xf]
      %v530 = vld [vmem:[%s4 + $0x8] sm:$0xf]
      %v531 = vld [vmem:[%s4 + $0xc] sm:$0xf]
      %v536 = vunpack.c.l.b16 %v524
      %v537 = vunpack.c.l.b16 %v525
      %v538 = vunpack.c.l.b16 %v526
      %v539 = vunpack.c.l.b16 %v527
      %v540 = vpack.c.b16 %v537, %v536
      %v541 = vpack.c.b16 %v539, %v538
      %v546 = vunpack.c.l.b16 %v528
      %v547 = vunpack.c.l.b16 %v529
      %v548 = vunpack.c.l.b16 %v530
      %v549 = vunpack.c.l.b16 %v531
      %v550 = vpack.c.b16 %v547, %v546
      %v551 = vpack.c.b16 %v549, %v548
      %vm554 = vcmask 261120
      %v556 = vsel %vm554, %v540, 0
      %v559 = vsel %vm554, %v541, 0
      %561 = vmatprep.subr.bf16.mxu0 0
      %562 = vmatpush1.bf16.msra.mxu0 0
      %563 = vmatprep.subr.bf16.mxu0 0
      %564 = vmatpush1.bf16.msra.mxu0 0
      %565 = vmatprep.subr.bf16.mxu0 0
      %566 = vmatpush1.bf16.msra.mxu0 0
      %567 = vmatprep.subr.bf16.mxu0 0
      %568 = vmatpush1.bf16.msra.mxu0 0
      %569 = vmatprep.subr.bf16.mxu0 0
      %570 = vmatpush1.bf16.msra.mxu0 0
      %571 = vmatprep.subr.bf16.mxu0 0
      %572 = vmatpush1.bf16.msra.mxu0 0
      %573 = vmatprep.subr.bf16.mxu0 0
      %574 = vmatpush1.bf16.msra.mxu0 %v551
      %575 = vmatprep.subr.bf16.mxu0 0
      %576 = vmatpush1.bf16.msra.mxu0 %v550
      %577 = vmatprep.subr.bf16.mxu0 0
      %578 = vmatpush2.bf16.msra.mxu0 0
      %579 = vmatprep.subr.bf16.mxu0 0
      %580 = vmatpush2.bf16.msra.mxu0 0
      %581 = vmatprep.subr.bf16.mxu0 0
      %582 = vmatpush2.bf16.msra.mxu0 0
      %583 = vmatprep.subr.bf16.mxu0 0
      %584 = vmatpush2.bf16.msra.mxu0 0
      %585 = vmatprep.subr.bf16.mxu0 0
      %586 = vmatpush2.bf16.msra.mxu0 0
      %587 = vmatprep.subr.bf16.mxu0 0
      %588 = vmatpush2.bf16.msra.mxu0 0
      %589 = vmatprep.subr.bf16.mxu0 0
      %590 = vmatpush2.bf16.msra.mxu0 0
      %591 = vmatprep.subr.bf16.mxu0 0
      %592 = vmatpush2.bf16.msra.mxu0 0
      %593 = vmatprep.mubr.bf16.mxu0 0
      %594 = vmatmul.mubr.bf16.gmra.mxu0 %v556
      %v595 = vpop.f32.mrf.mxu0
      %v596 = vadd.f32 0.0, %v595
      %v597 = vpop.f32.mrf.mxu0
      %v598 = vpop.f32.mrf.mxu0
      %v599 = vadd.f32 0.0, %v598
      %v600 = vpop.f32.mrf.mxu0
      %601 = vmatprep.mubr.bf16.mxu0 0
      %602 = vmatmul.mubr.bf16.gmra.mxu0 %v559
      %v603 = vpop.f32.mrf.mxu0
      %v604 = vadd.f32 0.0, %v603
      %v605 = vpop.f32.mrf.mxu0
      %v606 = vpop.f32.mrf.mxu0
      %v607 = vadd.f32 0.0, %v606
      %v608 = vpop.f32.mrf.mxu0
      %609 = vdwg.mxu0
      %v614 = vunpack.c.l.b16 %v516
      %v615 = vunpack.c.l.b16 %v517
      %v616 = vunpack.c.l.b16 %v518
      %v617 = vunpack.c.l.b16 %v519
      %v618 = vpack.c.b16 %v615, %v614
      %v619 = vpack.c.b16 %v617, %v616
      %v624 = vunpack.c.l.b16 %v520
      %v625 = vunpack.c.l.b16 %v521
      %v626 = vunpack.c.l.b16 %v522
      %v627 = vunpack.c.l.b16 %v523
      %v628 = vpack.c.b16 %v625, %v624
      %v629 = vpack.c.b16 %v627, %v626
      %v633 = vsel %vm554, %v618, 0
      %v636 = vsel %vm554, %v619, 0
      %638 = vmatprep.subr.bf16.mxu0 0
      %639 = vmatpush1.bf16.msra.mxu0 0
      %640 = vmatprep.subr.bf16.mxu0 0
      %641 = vmatpush1.bf16.msra.mxu0 0
      %642 = vmatprep.subr.bf16.mxu0 0
      %643 = vmatpush1.bf16.msra.mxu0 0
      %644 = vmatprep.subr.bf16.mxu0 0
      %645 = vmatpush1.bf16.msra.mxu0 0
      %646 = vmatprep.subr.bf16.mxu0 0
      %647 = vmatpush1.bf16.msra.mxu0 0
      %648 = vmatprep.subr.bf16.mxu0 0
      %649 = vmatpush1.bf16.msra.mxu0 0
      %650 = vmatprep.subr.bf16.mxu0 0
      %651 = vmatpush1.bf16.msra.mxu0 %v629
      %652 = vmatprep.subr.bf16.mxu0 0
      %653 = vmatpush1.bf16.msra.mxu0 %v628
      %654 = vmatprep.subr.bf16.mxu0 0
      %655 = vmatpush2.bf16.msra.mxu0 0
      %656 = vmatprep.subr.bf16.mxu0 0
      %657 = vmatpush2.bf16.msra.mxu0 0
      %658 = vmatprep.subr.bf16.mxu0 0
      %659 = vmatpush2.bf16.msra.mxu0 0
      %660 = vmatprep.subr.bf16.mxu0 0
      %661 = vmatpush2.bf16.msra.mxu0 0
      %662 = vmatprep.subr.bf16.mxu0 0
      %663 = vmatpush2.bf16.msra.mxu0 0
      %664 = vmatprep.subr.bf16.mxu0 0
      %665 = vmatpush2.bf16.msra.mxu0 0
      %666 = vmatprep.subr.bf16.mxu0 0
      %667 = vmatpush2.bf16.msra.mxu0 0
      %668 = vmatprep.subr.bf16.mxu0 0
      %669 = vmatpush2.bf16.msra.mxu0 0
      %670 = vmatprep.mubr.bf16.mxu0 0
      %671 = vmatmul.mubr.bf16.gmra.mxu0 %v633
      %v672 = vpop.f32.mrf.mxu0
      %v673 = vadd.f32 %v596, %v672
      %v674 = vpop.f32.mrf.mxu0
      %v675 = vpop.f32.mrf.mxu0
      %v676 = vadd.f32 %v599, %v675
      %v677 = vpop.f32.mrf.mxu0
      %678 = vmatprep.mubr.bf16.mxu0 0
      %679 = vmatmul.mubr.bf16.gmra.mxu0 %v636
      %v680 = vpop.f32.mrf.mxu0
      %v681 = vadd.f32 %v604, %v680
      %v682 = vpop.f32.mrf.mxu0
      %v683 = vpop.f32.mrf.mxu0
      %v684 = vadd.f32 %v607, %v683
      %v685 = vpop.f32.mrf.mxu0
      %686 = vdwg.mxu0
      %v687 = vld [vmem:[%s507] sm:$0xf]
      %v688 = vld [vmem:[%s507 + $0x4] sm:$0xf]
      %v689 = vld [vmem:[%s507 + $0x8] sm:$0xf]
      %v690 = vld [vmem:[%s507 + $0xc] sm:$0xf]
      %v691 = vld [vmem:[%s5] sm:$0xf]
      %v692 = vld [vmem:[%s5 + $0x4] sm:$0xf]
      %v693 = vld [vmem:[%s5 + $0x8] sm:$0xf]
      %v694 = vld [vmem:[%s5 + $0xc] sm:$0xf]
      %v695 = vld [vmem:[%s5 + $0x10] sm:$0xf]
      %v696 = vld [vmem:[%s5 + $0x14] sm:$0xf]
      %v697 = vld [vmem:[%s5 + $0x18] sm:$0xf]
      %v698 = vld [vmem:[%s5 + $0x1c] sm:$0xf]
      %v703 = vunpack.c.l.b16 %v687
      %v704 = vunpack.c.l.b16 %v688
      %v705 = vunpack.c.l.b16 %v689
      %v706 = vunpack.c.l.b16 %v690
      %v707 = vpack.c.b16 %v704, %v703
      %v708 = vpack.c.b16 %v706, %v705
      %v717 = vunpack.c.l.b16 %v691
      %v718 = vunpack.c.l.b16 %v692
      %v719 = vunpack.c.l.b16 %v693
      %v720 = vunpack.c.l.b16 %v694
      %v721 = vunpack.c.l.b16 %v695
      %v722 = vunpack.c.l.b16 %v696
      %v723 = vunpack.c.l.b16 %v697
      %v724 = vunpack.c.l.b16 %v698
      %v725 = vpack.c.b16 %v718, %v717
      %v726 = vpack.c.b16 %v720, %v719
      %v727 = vpack.c.b16 %v722, %v721
      %v728 = vpack.c.b16 %v724, %v723
      %vm733 = vcmask 523264
      %v735 = vsel %vm733, %v707, 0
      %v738 = vsel %vm733, %v708, 0
      %740 = vmatprep.subr.bf16.mxu0 0
      %741 = vmatpush1.bf16.msra.mxu0 0
      %742 = vmatprep.subr.bf16.mxu0 0
      %743 = vmatpush1.bf16.msra.mxu0 0
      %744 = vmatprep.subr.bf16.mxu0 0
      %745 = vmatpush1.bf16.msra.mxu0 0
      %746 = vmatprep.subr.bf16.mxu0 0
      %747 = vmatpush1.bf16.msra.mxu0 0
      %748 = vmatprep.subr.bf16.mxu0 0
      %749 = vmatpush1.bf16.msra.mxu0 %v728
      %750 = vmatprep.subr.bf16.mxu0 0
      %751 = vmatpush1.bf16.msra.mxu0 %v727
      %752 = vmatprep.subr.bf16.mxu0 0
      %753 = vmatpush1.bf16.msra.mxu0 %v726
      %754 = vmatprep.subr.bf16.mxu0 0
      %755 = vmatpush1.bf16.msra.mxu0 %v725
      %756 = vmatprep.subr.bf16.mxu0 0
      %757 = vmatpush2.bf16.msra.mxu0 0
      %758 = vmatprep.subr.bf16.mxu0 0
      %759 = vmatpush2.bf16.msra.mxu0 0
      %760 = vmatprep.subr.bf16.mxu0 0
      %761 = vmatpush2.bf16.msra.mxu0 0
      %762 = vmatprep.subr.bf16.mxu0 0
      %763 = vmatpush2.bf16.msra.mxu0 0
      %764 = vmatprep.subr.bf16.mxu0 0
      %765 = vmatpush2.bf16.msra.mxu0 0
      %766 = vmatprep.subr.bf16.mxu0 0
      %767 = vmatpush2.bf16.msra.mxu0 0
      %768 = vmatprep.subr.bf16.mxu0 0
      %769 = vmatpush2.bf16.msra.mxu0 0
      %770 = vmatprep.subr.bf16.mxu0 0
      %771 = vmatpush2.bf16.msra.mxu0 0
      %772 = vmatprep.mubr.bf16.mxu0 0
      %773 = vmatmul.mubr.bf16.gmra.mxu0 %v735
      %v774 = vpop.f32.mrf.mxu0
      %v775 = vadd.f32 0.0, %v774
      %v776 = vpop.f32.mrf.mxu0
      %v777 = vpop.f32.mrf.mxu0
      %v778 = vadd.f32 0.0, %v777
      %v779 = vpop.f32.mrf.mxu0
      %780 = vmatprep.mubr.bf16.mxu0 0
      %781 = vmatmul.mubr.bf16.gmra.mxu0 %v738
      %v782 = vpop.f32.mrf.mxu0
      %v783 = vadd.f32 0.0, %v782
      %v784 = vpop.f32.mrf.mxu0
      %v785 = vpop.f32.mrf.mxu0
      %v786 = vadd.f32 0.0, %v785
      %v787 = vpop.f32.mrf.mxu0
      %788 = vdwg.mxu0
      %v789 = vadd.f32 %v673, %v775
      %v790 = vadd.f32 %v676, %v778
      %v791 = vadd.f32 %v681, %v783
      %v792 = vadd.f32 %v684, %v786
      %v793 = vld [vmem:[%s6] sm:$0x1]
      %v795 = vlaneseq
      %v796 = vshrl.u32 %v795, 7
      %v797 = vsub.s32 0, %v796
      %v798 = vrot.slane %v793, %v797
      %v800 = vadd.f32 %v789, %v798
      %v801 = vadd.f32 %v790, %v798
      %v802 = vadd.f32 %v791, %v798
      %v803 = vadd.f32 %v792, %v798
      %vm804 = vcmp.gt.f32.partialorder %v800, 0.0
      %vm805 = vcmp.gt.f32.partialorder %v801, 0.0
      %vm806 = vcmp.gt.f32.partialorder %v802, 0.0
      %vm807 = vcmp.gt.f32.partialorder %v803, 0.0
      %v808 = vmul.f32 %v800, 0.01
      %v809 = vmul.f32 %v801, 0.01
      %v810 = vmul.f32 %v802, 0.01
      %v811 = vmul.f32 %v803, 0.01
      %v812 = vsel %vm804, %v800, %v808
      %v813 = vsel %vm805, %v801, %v809
      %v814 = vsel %vm806, %v802, %v810
      %v815 = vsel %vm807, %v803, %v811
      %v816 = vpack.c.bf16 %v813, %v812
      %v817 = vpack.c.bf16 %v815, %v814
      %v818 = vld [vmem:[%s7] sm:$0xf]
      %v819 = vld [vmem:[%s7 + $0x4] sm:$0xf]
      %v820 = vld [vmem:[%s7 + $0x8] sm:$0xf]
      %v821 = vld [vmem:[%s7 + $0xc] sm:$0xf]
      %v822 = vld [vmem:[%s7 + $0x10] sm:$0xf]
      %v823 = vld [vmem:[%s7 + $0x14] sm:$0xf]
      %v824 = vld [vmem:[%s7 + $0x18] sm:$0xf]
      %v825 = vld [vmem:[%s7 + $0x1c] sm:$0xf]
      %v826 = vld [vmem:[%s7 + $0x20] sm:$0xf]
      %v827 = vld [vmem:[%s7 + $0x24] sm:$0xf]
      %v828 = vld [vmem:[%s7 + $0x28] sm:$0xf]
      %v829 = vld [vmem:[%s7 + $0x2c] sm:$0xf]
      %v830 = vld [vmem:[%s7 + $0x30] sm:$0xf]
      %v831 = vld [vmem:[%s7 + $0x34] sm:$0xf]
      %v832 = vld [vmem:[%s7 + $0x38] sm:$0xf]
      %v833 = vld [vmem:[%s7 + $0x3c] sm:$0xf]
      %v834 = vld [vmem:[%s8] sm:$0x1]
      %v836 = vlaneseq
      %v837 = vshrl.u32 %v836, 7
      %v838 = vsub.s32 0, %v837
      %v839 = vrot.slane %v834, %v838
      %v857 = vunpack.c.l.b16 %v818
      %v858 = vunpack.c.l.b16 %v819
      %v859 = vunpack.c.l.b16 %v820
      %v860 = vunpack.c.l.b16 %v821
      %v861 = vunpack.c.l.b16 %v822
      %v862 = vunpack.c.l.b16 %v823
      %v863 = vunpack.c.l.b16 %v824
      %v864 = vunpack.c.l.b16 %v825
      %v865 = vunpack.c.l.b16 %v826
      %v866 = vunpack.c.l.b16 %v827
      %v867 = vunpack.c.l.b16 %v828
      %v868 = vunpack.c.l.b16 %v829
      %v869 = vunpack.c.l.b16 %v830
      %v870 = vunpack.c.l.b16 %v831
      %v871 = vunpack.c.l.b16 %v832
      %v872 = vunpack.c.l.b16 %v833
      %v873 = vpack.c.b16 %v858, %v857
      %v874 = vpack.c.b16 %v860, %v859
      %v875 = vpack.c.b16 %v862, %v861
      %v876 = vpack.c.b16 %v864, %v863
      %v877 = vpack.c.b16 %v866, %v865
      %v878 = vpack.c.b16 %v868, %v867
      %v879 = vpack.c.b16 %v870, %v869
      %v880 = vpack.c.b16 %v872, %v871
      %889 = vmatprep.subr.bf16.mxu0 0
      %890 = vmatpush1.bf16.msra.mxu0 %v880
      %891 = vmatprep.subr.bf16.mxu0 0
      %892 = vmatpush1.bf16.msra.mxu0 %v879
      %893 = vmatprep.subr.bf16.mxu0 0
      %894 = vmatpush1.bf16.msra.mxu0 %v878
      %895 = vmatprep.subr.bf16.mxu0 0
      %896 = vmatpush1.bf16.msra.mxu0 %v877
      %897 = vmatprep.subr.bf16.mxu0 0
      %898 = vmatpush1.bf16.msra.mxu0 %v876
      %899 = vmatprep.subr.bf16.mxu0 0
      %900 = vmatpush1.bf16.msra.mxu0 %v875
      %901 = vmatprep.subr.bf16.mxu0 0
      %902 = vmatpush1.bf16.msra.mxu0 %v874
      %903 = vmatprep.subr.bf16.mxu0 0
      %904 = vmatpush1.bf16.msra.mxu0 %v873
      %905 = vmatprep.subr.bf16.mxu0 0
      %906 = vmatpush2.bf16.msra.mxu0 0
      %907 = vmatprep.subr.bf16.mxu0 0
      %908 = vmatpush2.bf16.msra.mxu0 0
      %909 = vmatprep.subr.bf16.mxu0 0
      %910 = vmatpush2.bf16.msra.mxu0 0
      %911 = vmatprep.subr.bf16.mxu0 0
      %912 = vmatpush2.bf16.msra.mxu0 0
      %913 = vmatprep.subr.bf16.mxu0 0
      %914 = vmatpush2.bf16.msra.mxu0 0
      %915 = vmatprep.subr.bf16.mxu0 0
      %916 = vmatpush2.bf16.msra.mxu0 0
      %917 = vmatprep.subr.bf16.mxu0 0
      %918 = vmatpush2.bf16.msra.mxu0 0
      %919 = vmatprep.subr.bf16.mxu0 0
      %920 = vmatpush2.bf16.msra.mxu0 0
      %921 = vmatprep.mubr.bf16.mxu0 0
      %922 = vmatmul.mubr.bf16.gmra.mxu0 %v816
      %v923 = vpop.f32.mrf.mxu0
      %v924 = vadd.f32 %v839, %v923
      %v925 = vpop.f32.mrf.mxu0
      %v926 = vpop.f32.mrf.mxu0
      %v927 = vadd.f32 %v839, %v926
      %v928 = vpop.f32.mrf.mxu0
      %929 = vmatprep.mubr.bf16.mxu0 0
      %930 = vmatmul.mubr.bf16.gmra.mxu0 %v817
      %v931 = vpop.f32.mrf.mxu0
      %v932 = vadd.f32 %v839, %v931
      %v933 = vpop.f32.mrf.mxu0
      %v934 = vpop.f32.mrf.mxu0
      %v935 = vadd.f32 %v839, %v934
      %v936 = vpop.f32.mrf.mxu0
      %937 = vdwg.mxu0
      %vm938 = vcmp.gt.f32.partialorder %v924, 0.0
      %vm939 = vcmp.gt.f32.partialorder %v927, 0.0
      %vm940 = vcmp.gt.f32.partialorder %v932, 0.0
      %vm941 = vcmp.gt.f32.partialorder %v935, 0.0
      %v942 = vmul.f32 %v924, 0.01
      %v943 = vmul.f32 %v927, 0.01
      %v944 = vmul.f32 %v932, 0.01
      %v945 = vmul.f32 %v935, 0.01
      %v946 = vsel %vm938, %v924, %v942
      %v947 = vsel %vm939, %v927, %v943
      %v948 = vsel %vm940, %v932, %v944
      %v949 = vsel %vm941, %v935, %v945
      %v950 = vpack.c.bf16 %v947, %v946
      %v951 = vpack.c.bf16 %v949, %v948
      %v952 = vld [vmem:[%s9] sm:$0xf]
      %v953 = vld [vmem:[%s9 + $0x4] sm:$0xf]
      %v954 = vld [vmem:[%s9 + $0x8] sm:$0xf]
      %v955 = vld [vmem:[%s9 + $0xc] sm:$0xf]
      %v956 = vld [vmem:[%s9 + $0x10] sm:$0xf]
      %v957 = vld [vmem:[%s9 + $0x14] sm:$0xf]
      %v958 = vld [vmem:[%s9 + $0x18] sm:$0xf]
      %v959 = vld [vmem:[%s9 + $0x1c] sm:$0xf]
      %v960 = vld [vmem:[%s9 + $0x20] sm:$0xf]
      %v961 = vld [vmem:[%s9 + $0x24] sm:$0xf]
      %v962 = vld [vmem:[%s9 + $0x28] sm:$0xf]
      %v963 = vld [vmem:[%s9 + $0x2c] sm:$0xf]
      %v964 = vld [vmem:[%s9 + $0x30] sm:$0xf]
      %v965 = vld [vmem:[%s9 + $0x34] sm:$0xf]
      %v966 = vld [vmem:[%s9 + $0x38] sm:$0xf]
      %v967 = vld [vmem:[%s9 + $0x3c] sm:$0xf]
      %v968 = vld [vmem:[%s10] sm:$0x1]
      %v970 = vlaneseq
      %v971 = vshrl.u32 %v970, 7
      %v972 = vsub.s32 0, %v971
      %v973 = vrot.slane %v968, %v972
      %v991 = vunpack.c.l.b16 %v952
      %v992 = vunpack.c.l.b16 %v953
      %v993 = vunpack.c.l.b16 %v954
      %v994 = vunpack.c.l.b16 %v955
      %v995 = vunpack.c.l.b16 %v956
      %v996 = vunpack.c.l.b16 %v957
      %v997 = vunpack.c.l.b16 %v958
      %v998 = vunpack.c.l.b16 %v959
      %v999 = vunpack.c.l.b16 %v960
      %v1000 = vunpack.c.l.b16 %v961
      %v1001 = vunpack.c.l.b16 %v962
      %v1002 = vunpack.c.l.b16 %v963
      %v1003 = vunpack.c.l.b16 %v964
      %v1004 = vunpack.c.l.b16 %v965
      %v1005 = vunpack.c.l.b16 %v966
      %v1006 = vunpack.c.l.b16 %v967
      %v1007 = vpack.c.b16 %v992, %v991
      %v1008 = vpack.c.b16 %v994, %v993
      %v1009 = vpack.c.b16 %v996, %v995
      %v1010 = vpack.c.b16 %v998, %v997
      %v1011 = vpack.c.b16 %v1000, %v999
      %v1012 = vpack.c.b16 %v1002, %v1001
      %v1013 = vpack.c.b16 %v1004, %v1003
      %v1014 = vpack.c.b16 %v1006, %v1005
      %1023 = vmatprep.subr.bf16.mxu0 0
      %1024 = vmatpush1.bf16.msra.mxu0 %v1014
      %1025 = vmatprep.subr.bf16.mxu0 0
      %1026 = vmatpush1.bf16.msra.mxu0 %v1013
      %1027 = vmatprep.subr.bf16.mxu0 0
      %1028 = vmatpush1.bf16.msra.mxu0 %v1012
      %1029 = vmatprep.subr.bf16.mxu0 0
      %1030 = vmatpush1.bf16.msra.mxu0 %v1011
      %1031 = vmatprep.subr.bf16.mxu0 0
      %1032 = vmatpush1.bf16.msra.mxu0 %v1010
      %1033 = vmatprep.subr.bf16.mxu0 0
      %1034 = vmatpush1.bf16.msra.mxu0 %v1009
      %1035 = vmatprep.subr.bf16.mxu0 0
      %1036 = vmatpush1.bf16.msra.mxu0 %v1008
      %1037 = vmatprep.subr.bf16.mxu0 0
      %1038 = vmatpush1.bf16.msra.mxu0 %v1007
      %1039 = vmatprep.subr.bf16.mxu0 0
      %1040 = vmatpush2.bf16.msra.mxu0 0
      %1041 = vmatprep.subr.bf16.mxu0 0
      %1042 = vmatpush2.bf16.msra.mxu0 0
      %1043 = vmatprep.subr.bf16.mxu0 0
      %1044 = vmatpush2.bf16.msra.mxu0 0
      %1045 = vmatprep.subr.bf16.mxu0 0
      %1046 = vmatpush2.bf16.msra.mxu0 0
      %1047 = vmatprep.subr.bf16.mxu0 0
      %1048 = vmatpush2.bf16.msra.mxu0 0
      %1049 = vmatprep.subr.bf16.mxu0 0
      %1050 = vmatpush2.bf16.msra.mxu0 0
      %1051 = vmatprep.subr.bf16.mxu0 0
      %1052 = vmatpush2.bf16.msra.mxu0 0
      %1053 = vmatprep.subr.bf16.mxu0 0
      %1054 = vmatpush2.bf16.msra.mxu0 0
      %1055 = vmatprep.mubr.bf16.mxu0 0
      %1056 = vmatmul.mubr.bf16.gmra.mxu0 %v950
      %v1057 = vpop.f32.mrf.mxu0
      %v1058 = vadd.f32 %v973, %v1057
      %v1059 = vpop.f32.mrf.mxu0
      %v1060 = vpop.f32.mrf.mxu0
      %v1061 = vadd.f32 %v973, %v1060
      %v1062 = vpop.f32.mrf.mxu0
      %1063 = vmatprep.mubr.bf16.mxu0 0
      %1064 = vmatmul.mubr.bf16.gmra.mxu0 %v951
      %v1065 = vpop.f32.mrf.mxu0
      %v1066 = vadd.f32 %v973, %v1065
      %v1067 = vpop.f32.mrf.mxu0
      %v1068 = vpop.f32.mrf.mxu0
      %v1069 = vadd.f32 %v973, %v1068
      %v1070 = vpop.f32.mrf.mxu0
      %1071 = vdwg.mxu0
      %vm1072 = vcmp.gt.f32.partialorder %v1058, 0.0
      %vm1073 = vcmp.gt.f32.partialorder %v1061, 0.0
      %vm1074 = vcmp.gt.f32.partialorder %v1066, 0.0
      %vm1075 = vcmp.gt.f32.partialorder %v1069, 0.0
      %v1076 = vmul.f32 %v1058, 0.01
      %v1077 = vmul.f32 %v1061, 0.01
      %v1078 = vmul.f32 %v1066, 0.01
      %v1079 = vmul.f32 %v1069, 0.01
      %v1080 = vsel %vm1072, %v1058, %v1076
      %v1081 = vsel %vm1073, %v1061, %v1077
      %v1082 = vsel %vm1074, %v1066, %v1078
      %v1083 = vsel %vm1075, %v1069, %v1079
      %v1084 = vld [vmem:[%s11] sm:$0xff]
      %v1085 = vld [vmem:[%s11 + $0x8] sm:$0xff]
      %v1086 = vld [vmem:[%s11 + $0x10] sm:$0xff]
      %v1087 = vld [vmem:[%s11 + $0x18] sm:$0xff]
      %v1088 = vld [vmem:[%s11 + $0x20] sm:$0xff]
      %v1089 = vld [vmem:[%s11 + $0x28] sm:$0xff]
      %v1090 = vld [vmem:[%s11 + $0x30] sm:$0xff]
      %v1091 = vld [vmem:[%s11 + $0x38] sm:$0xff]
      %v1092 = vld [vmem:[%s11 + $0x40] sm:$0xff]
      %v1093 = vld [vmem:[%s11 + $0x48] sm:$0xff]
      %v1094 = vld [vmem:[%s11 + $0x50] sm:$0xff]
      %v1095 = vld [vmem:[%s11 + $0x58] sm:$0xff]
      %v1096 = vld [vmem:[%s11 + $0x60] sm:$0xff]
      %v1097 = vld [vmem:[%s11 + $0x68] sm:$0xff]
      %v1098 = vld [vmem:[%s11 + $0x70] sm:$0xff]
      %v1099 = vld [vmem:[%s11 + $0x78] sm:$0xff]
      %1100 = vmatprep.subr.mxu0 0.0
      %1101 = vmatpush1.msra.mxu0 %v1099
      %1102 = vmatprep.subr.mxu0 0.0
      %1103 = vmatpush1.msra.mxu0 %v1098
      %1104 = vmatprep.subr.mxu0 0.0
      %1105 = vmatpush1.msra.mxu0 %v1097
      %1106 = vmatprep.subr.mxu0 0.0
      %1107 = vmatpush1.msra.mxu0 %v1096
      %1108 = vmatprep.subr.mxu0 0.0
      %1109 = vmatpush1.msra.mxu0 %v1095
      %1110 = vmatprep.subr.mxu0 0.0
      %1111 = vmatpush1.msra.mxu0 %v1094
      %1112 = vmatprep.subr.mxu0 0.0
      %1113 = vmatpush1.msra.mxu0 %v1093
      %1114 = vmatprep.subr.mxu0 0.0
      %1115 = vmatpush1.msra.mxu0 %v1092
      %1116 = vmatprep.subr.mxu0 0.0
      %1117 = vmatpush1.msra.mxu0 %v1091
      %1118 = vmatprep.subr.mxu0 0.0
      %1119 = vmatpush1.msra.mxu0 %v1090
      %1120 = vmatprep.subr.mxu0 0.0
      %1121 = vmatpush1.msra.mxu0 %v1089
      %1122 = vmatprep.subr.mxu0 0.0
      %1123 = vmatpush1.msra.mxu0 %v1088
      %1124 = vmatprep.subr.mxu0 0.0
      %1125 = vmatpush1.msra.mxu0 %v1087
      %1126 = vmatprep.subr.mxu0 0.0
      %1127 = vmatpush1.msra.mxu0 %v1086
      %1128 = vmatprep.subr.mxu0 0.0
      %1129 = vmatpush1.msra.mxu0 %v1085
      %1130 = vmatprep.subr.mxu0 0.0
      %1131 = vmatpush1.msra.mxu0 %v1084
      %1132 = vmatprep.subr.mxu0 0.0
      %1133 = vmatpush2.msra.mxu0 0.0
      %1134 = vmatprep.subr.mxu0 0.0
      %1135 = vmatpush2.msra.mxu0 0.0
      %1136 = vmatprep.subr.mxu0 0.0
      %1137 = vmatpush2.msra.mxu0 0.0
      %1138 = vmatprep.subr.mxu0 0.0
      %1139 = vmatpush2.msra.mxu0 0.0
      %1140 = vmatprep.subr.mxu0 0.0
      %1141 = vmatpush2.msra.mxu0 0.0
      %1142 = vmatprep.subr.mxu0 0.0
      %1143 = vmatpush2.msra.mxu0 0.0
      %1144 = vmatprep.subr.mxu0 0.0
      %1145 = vmatpush2.msra.mxu0 0.0
      %1146 = vmatprep.subr.mxu0 0.0
      %1147 = vmatpush2.msra.mxu0 0.0
      %1148 = vmatprep.subr.mxu0 0.0
      %1149 = vmatpush2.msra.mxu0 0.0
      %1150 = vmatprep.subr.mxu0 0.0
      %1151 = vmatpush2.msra.mxu0 0.0
      %1152 = vmatprep.subr.mxu0 0.0
      %1153 = vmatpush2.msra.mxu0 0.0
      %1154 = vmatprep.subr.mxu0 0.0
      %1155 = vmatpush2.msra.mxu0 0.0
      %1156 = vmatprep.subr.mxu0 0.0
      %1157 = vmatpush2.msra.mxu0 0.0
      %1158 = vmatprep.subr.mxu0 0.0
      %1159 = vmatpush2.msra.mxu0 0.0
      %1160 = vmatprep.subr.mxu0 0.0
      %1161 = vmatpush2.msra.mxu0 0.0
      %1162 = vmatprep.subr.mxu0 0.0
      %1163 = vmatpush2.msra.mxu0 0.0
      %1164 = vmatprep.mubr.f32.mxu0 0.0
      %1165 = vmatmul.mubr.f32.gmra.mxu0 %v1080
      %v1166 = vpop.f32.mrf.mxu0
      %v1167 = vadd.f32 0.0, %v1166
      %v1168 = vpop.f32.mrf.mxu0
      %1169 = vmatprep.mubr.f32.mxu0 0.0
      %1170 = vmatmul.mubr.f32.gmra.mxu0 %v1081
      %v1171 = vpop.f32.mrf.mxu0
      %v1172 = vadd.f32 0.0, %v1171
      %v1173 = vpop.f32.mrf.mxu0
      %1174 = vmatprep.mubr.f32.mxu0 0.0
      %1175 = vmatmul.mubr.f32.gmra.mxu0 %v1082
      %v1176 = vpop.f32.mrf.mxu0
      %v1177 = vadd.f32 0.0, %v1176
      %v1178 = vpop.f32.mrf.mxu0
      %1179 = vmatprep.mubr.f32.mxu0 0.0
      %1180 = vmatmul.mubr.f32.gmra.mxu0 %v1083
      %v1181 = vpop.f32.mrf.mxu0
      %v1182 = vadd.f32 0.0, %v1181
      %v1183 = vpop.f32.mrf.mxu0
      %1184 = vdwg.mxu0
      %v1185 = vsub.f32 %v1080, %v1167
      %v1186 = vsub.f32 %v1081, %v1172
      %v1187 = vsub.f32 %v1082, %v1177
      %v1188 = vsub.f32 %v1083, %v1182
      %v1189 = vmul.f32 %v1185, %v1185
      %v1190 = vmul.f32 %v1186, %v1186
      %v1191 = vmul.f32 %v1187, %v1187
      %v1192 = vmul.f32 %v1188, %v1188
      %1193 = vmatprep.subr.mxu0 0.0
      %1194 = vmatpush1.msra.mxu0 %v1099
      %1195 = vmatprep.subr.mxu0 0.0
      %1196 = vmatpush1.msra.mxu0 %v1098
      %1197 = vmatprep.subr.mxu0 0.0
      %1198 = vmatpush1.msra.mxu0 %v1097
      %1199 = vmatprep.subr.mxu0 0.0
      %1200 = vmatpush1.msra.mxu0 %v1096
      %1201 = vmatprep.subr.mxu0 0.0
      %1202 = vmatpush1.msra.mxu0 %v1095
      %1203 = vmatprep.subr.mxu0 0.0
      %1204 = vmatpush1.msra.mxu0 %v1094
      %1205 = vmatprep.subr.mxu0 0.0
      %1206 = vmatpush1.msra.mxu0 %v1093
      %1207 = vmatprep.subr.mxu0 0.0
      %1208 = vmatpush1.msra.mxu0 %v1092
      %1209 = vmatprep.subr.mxu0 0.0
      %1210 = vmatpush1.msra.mxu0 %v1091
      %1211 = vmatprep.subr.mxu0 0.0
      %1212 = vmatpush1.msra.mxu0 %v1090
      %1213 = vmatprep.subr.mxu0 0.0
      %1214 = vmatpush1.msra.mxu0 %v1089
      %1215 = vmatprep.subr.mxu0 0.0
      %1216 = vmatpush1.msra.mxu0 %v1088
      %1217 = vmatprep.subr.mxu0 0.0
      %1218 = vmatpush1.msra.mxu0 %v1087
      %1219 = vmatprep.subr.mxu0 0.0
      %1220 = vmatpush1.msra.mxu0 %v1086
      %1221 = vmatprep.subr.mxu0 0.0
      %1222 = vmatpush1.msra.mxu0 %v1085
      %1223 = vmatprep.subr.mxu0 0.0
      %1224 = vmatpush1.msra.mxu0 %v1084
      %1225 = vmatprep.subr.mxu0 0.0
      %1226 = vmatpush2.msra.mxu0 0.0
      %1227 = vmatprep.subr.mxu0 0.0
      %1228 = vmatpush2.msra.mxu0 0.0
      %1229 = vmatprep.subr.mxu0 0.0
      %1230 = vmatpush2.msra.mxu0 0.0
      %1231 = vmatprep.subr.mxu0 0.0
      %1232 = vmatpush2.msra.mxu0 0.0
      %1233 = vmatprep.subr.mxu0 0.0
      %1234 = vmatpush2.msra.mxu0 0.0
      %1235 = vmatprep.subr.mxu0 0.0
      %1236 = vmatpush2.msra.mxu0 0.0
      %1237 = vmatprep.subr.mxu0 0.0
      %1238 = vmatpush2.msra.mxu0 0.0
      %1239 = vmatprep.subr.mxu0 0.0
      %1240 = vmatpush2.msra.mxu0 0.0
      %1241 = vmatprep.subr.mxu0 0.0
      %1242 = vmatpush2.msra.mxu0 0.0
      %1243 = vmatprep.subr.mxu0 0.0
      %1244 = vmatpush2.msra.mxu0 0.0
      %1245 = vmatprep.subr.mxu0 0.0
      %1246 = vmatpush2.msra.mxu0 0.0
      %1247 = vmatprep.subr.mxu0 0.0
      %1248 = vmatpush2.msra.mxu0 0.0
      %1249 = vmatprep.subr.mxu0 0.0
      %1250 = vmatpush2.msra.mxu0 0.0
      %1251 = vmatprep.subr.mxu0 0.0
      %1252 = vmatpush2.msra.mxu0 0.0
      %1253 = vmatprep.subr.mxu0 0.0
      %1254 = vmatpush2.msra.mxu0 0.0
      %1255 = vmatprep.subr.mxu0 0.0
      %1256 = vmatpush2.msra.mxu0 0.0
      %1257 = vmatprep.mubr.f32.mxu0 0.0
      %1258 = vmatmul.mubr.f32.gmra.mxu0 %v1189
      %v1259 = vpop.f32.mrf.mxu0
      %v1260 = vadd.f32 1e-05, %v1259
      %v1261 = vpop.f32.mrf.mxu0
      %1262 = vmatprep.mubr.f32.mxu0 0.0
      %1263 = vmatmul.mubr.f32.gmra.mxu0 %v1190
      %v1264 = vpop.f32.mrf.mxu0
      %v1265 = vadd.f32 1e-05, %v1264
      %v1266 = vpop.f32.mrf.mxu0
      %1267 = vmatprep.mubr.f32.mxu0 0.0
      %1268 = vmatmul.mubr.f32.gmra.mxu0 %v1191
      %v1269 = vpop.f32.mrf.mxu0
      %v1270 = vadd.f32 1e-05, %v1269
      %v1271 = vpop.f32.mrf.mxu0
      %1272 = vmatprep.mubr.f32.mxu0 0.0
      %1273 = vmatmul.mubr.f32.gmra.mxu0 %v1192
      %v1274 = vpop.f32.mrf.mxu0
      %v1275 = vadd.f32 1e-05, %v1274
      %v1276 = vpop.f32.mrf.mxu0
      %1277 = vdwg.mxu0
      %v1278 = vrsqrt.pop %v1260
      %v1279 = vrsqrt.pop %v1265
      %v1280 = vrsqrt.pop %v1270
      %v1281 = vrsqrt.pop %v1275
      %v1282 = vmul.f32 %v1185, %v1278
      %v1283 = vmul.f32 %v1186, %v1279
      %v1284 = vmul.f32 %v1187, %v1280
      %v1285 = vmul.f32 %v1188, %v1281
      %v1286 = vld [vmem:[%s12] sm:$0x1]
      %v1288 = vlaneseq
      %v1289 = vshrl.u32 %v1288, 7
      %v1290 = vsub.s32 0, %v1289
      %v1291 = vrot.slane %v1286, %v1290
      %v1293 = vmul.f32 %v1282, %v1291
      %v1294 = vmul.f32 %v1283, %v1291
      %v1295 = vmul.f32 %v1284, %v1291
      %v1296 = vmul.f32 %v1285, %v1291
      %v1297 = vld [vmem:[%s13] sm:$0x1]
      %v1299 = vlaneseq
      %v1300 = vshrl.u32 %v1299, 7
      %v1301 = vsub.s32 0, %v1300
      %v1302 = vrot.slane %v1297, %v1301
      %v1304 = vadd.f32 %v1293, %v1302
      %v1305 = vadd.f32 %v1294, %v1302
      %v1306 = vadd.f32 %v1295, %v1302
      %v1307 = vadd.f32 %v1296, %v1302
      %1308 = vst [vmem:[%s513] sm:$0xff] %v1304
      %1309 = vst [vmem:[%s513 + $0x8] sm:$0xff] %v1305
      %1310 = vst [vmem:[%s513 + $0x10] sm:$0xff] %v1306
      %1311 = vst [vmem:[%s513 + $0x18] sm:$0xff] %v1307
      %s1312 = smul.u32 4, %s25
      %p1313 = scmp.lt.s32.totalorder %s1312, 7
      %s1314 = scalar_select %p1313, %s1312, 7
      %s1315 = smul.addr %s1314, 8
      %s1316 = scalar_lea.vmem %s14, %s1315
      // Predicated region
      $region77: #{edge_model_forward.1} parent=75 // pred_check
        %p1317 = pneg %p352
      $region78: #{edge_model_forward.1} parent=75 // pred_check_branch
        %1319 = sbr.rel (%p1317) target = $region80
      $region79: #{edge_model_forward.1} parent=75 // pred_region
        %s1320 = smul.u32 4, %s25
      $region80: #{edge_model_forward.1} parent=75 // pred_fallthru
        _
    $region76: #{edge_model_forward.1} parent=5 // pred_fallthru
      _
    %p1321 = scmp.le.s32.totalorder 2, %s20
    // Predicated region
    $region81: #{edge_model_forward.1} parent=5 // pred_check
      %p1322 = pneg %p1321
    $region82: #{edge_model_forward.1} parent=5 // pred_check_branch
      %1324 = sbr.rel (%p1322) target = $region84
    $region83: #{edge_model_forward.1} parent=5 // pred_region
      %s1325 = ssub.s32 %s20, 2
      // Predicated region
      $region85: #{edge_model_forward.1} parent=83 // pred_check
        %p1326 = pneg %p358
      $region86: #{edge_model_forward.1} parent=83 // pred_check_branch
        %1328 = sbr.rel (%p1326) target = $region88
      $region87: #{edge_model_forward.1} parent=83 // pred_region
        %s1329 = smul.u32 4, %s26
        %p1330 = scmp.lt.s32.totalorder %s1329, 7
        %s1331 = scalar_select %p1330, %s1329, 7
        %s1332 = smul.addr %s1331, 8
        %s1333 = scalar_lea.vmem %s14, %s1332
      $region88: #{edge_model_forward.1} parent=83 // pred_fallthru
        _
    $region84: #{edge_model_forward.1} parent=5 // pred_fallthru
      _
  $region6: #{edge_model_forward.1} parent=0 // loop_footer
    %s24 = sadd.s32 1, %s20
  $region7: #{edge_model_forward.1} parent=0 // loop_footer_branch
    %19 = sbr.rel target = $region3
  $region8: #{edge_model_forward.1} parent=0 // loop_exit
    _

</llo_original>
